<compile_context>
chip_gen: v6e
topology: v6e:2x2x1
jax: 0.10.0
libtpu: 0.0.40
codegen_flags: <defaults>
</compile_context>

<pallas_src>
import functools

import jax
import jax.numpy as jnp
from jax import lax
from jax.experimental import pallas as pl
from jax.experimental.pallas import tpu as pltpu

MXU_DTYPE = jnp.bfloat16        # MXU operand dtype; accumulation stays f32 everywhere
LN_EPS = 1e-12


# ----------------------------------------------------------------------------- helpers
def _full_spec(shape):
    # whole-array block, grid=() -> zero-arg index_map (accept any args to be safe)
    return pl.BlockSpec(shape, lambda *_: (0,) * len(shape))


def _mm(a, b):
    """a @ b on the MXU with bf16 operands, f32 accumulation."""
    return jnp.dot(a.astype(MXU_DTYPE), b.astype(MXU_DTYPE),
                   preferred_element_type=jnp.float32)


def _mm_nt(a, b):
    """a @ b.T (contract last dims) without materializing a transpose."""
    return lax.dot_general(a.astype(MXU_DTYPE), b.astype(MXU_DTYPE),
                           (((1,), (1,)), ((), ())),
                           preferred_element_type=jnp.float32)


def _ln(x, g, b, eps):
    mu = jnp.mean(x, axis=-1, keepdims=True)
    var = jnp.mean((x - mu) ** 2, axis=-1, keepdims=True)
    return (x - mu) * lax.rsqrt(var + eps) * g + b


def _gelu(x):
    # tanh-approx GELU (HF BERT default is erf-GELU; diff ~1e-3, EUP-friendly)
    return 0.5 * x * (1.0 + jnp.tanh(0.7978845608028654 * (x + 0.044715 * x * x * x)))


# ----------------------------------------------------------------------------- kernels
def _layernorm_kernel(x_ref, g_ref, b_ref, o_ref, *, eps):
    o_ref[...] = _ln(x_ref[...], g_ref[...], b_ref[...], eps)


def pallas_layernorm(x, g, b, eps=LN_EPS):
    M, N = x.shape
    return pl.pallas_call(
        functools.partial(_layernorm_kernel, eps=eps),
        out_shape=jax.ShapeDtypeStruct((M, N), jnp.float32),
        in_specs=[_full_spec((M, N)), _full_spec((1, N)), _full_spec((1, N))],
        out_specs=_full_spec((M, N)),
    )(x, g.reshape(1, N), b.reshape(1, N))


def _encoder_layer_kernel(x_ref, mask_ref, wqkv_ref, bqkv_ref, wo_ref, bo_ref,
                          ln1g_ref, ln1b_ref, wi_ref, bi_ref, wo2_ref, bo2_ref,
                          ln2g_ref, ln2b_ref, o_ref, ctx_ref,
                          *, B, S, n_heads, head_dim, eps):
    """One full BERT encoder layer, fully fused in VMEM.

    x:(B*S, hidden)  mask:(B, S) 1/0  ->  o:(B*S, hidden)
    ctx_ref: VMEM scratch (B*S, hidden) for the attention context.
    """
    hidden = n_heads * head_dim
    x = x_ref[...]                                               # (B*S, hidden) f32

    # ---- fused QKV projection: one MXU pass with N = 3*hidden ----
    qkv = _mm(x, wqkv_ref[...]) + bqkv_ref[...]                  # (B*S, 3*hidden)
    q = qkv[:, 0 * hidden:1 * hidden]
    k = qkv[:, 1 * hidden:2 * hidden]
    v = qkv[:, 2 * hidden:3 * hidden]

    scale = 1.0 / (head_dim ** 0.5)
    # ---- attention, statically unrolled over (batch, head); mask built in-kernel ----
    for b in range(B):
        add_mask = (1.0 - mask_ref[b:b + 1, :]) * -10000.0       # (1, S) additive mask
        rows = slice(b * S, (b + 1) * S)
        for h in range(n_heads):
            cols = slice(h * head_dim, (h + 1) * head_dim)
            qh, kh, vh = q[rows, cols], k[rows, cols], v[rows, cols]   # (S, D)
            s = _mm_nt(qh, kh) * scale + add_mask                       # (S, S)
            s = s - jnp.max(s, axis=-1, keepdims=True)
            p = jnp.exp(s)
            p = p * pl.reciprocal(jnp.sum(p, axis=-1, keepdims=True), approx=True)
            ctx_ref[rows, cols] = _mm(p, vh)                            # (S, D)

    # ---- output projection + residual + LayerNorm (fused) ----
    attn = _mm(ctx_ref[...], wo_ref[...]) + bo_ref[...]
    h1 = _ln(attn + x, ln1g_ref[...], ln1b_ref[...], eps)

    # ---- FFN (GELU) + residual + LayerNorm (fused) ----
    f = _gelu(_mm(h1, wi_ref[...]) + bi_ref[...])
    f = _mm(f, wo2_ref[...]) + bo2_ref[...]
    o_ref[...] = _ln(f + h1, ln2g_ref[...], ln2b_ref[...], eps)


def pallas_encoder_layer(x2, mask_f, lyr, *, B, S, n_heads, head_dim):
    hidden = n_heads * head_dim
    inter = lyr["wi"].shape[1]
    M = B * S
    args = (
        x2, mask_f,
        lyr["wqkv"], lyr["bqkv"].reshape(1, 3 * hidden),
        lyr["wo"], lyr["bo"].reshape(1, hidden),
        lyr["ln1_g"].reshape(1, hidden), lyr["ln1_b"].reshape(1, hidden),
        lyr["wi"], lyr["bi"].reshape(1, inter),
        lyr["wo2"], lyr["bo2"].reshape(1, hidden),
        lyr["ln2_g"].reshape(1, hidden), lyr["ln2_b"].reshape(1, hidden),
    )
    return pl.pallas_call(
        functools.partial(_encoder_layer_kernel, B=B, S=S, n_heads=n_heads,
                          head_dim=head_dim, eps=LN_EPS),
        out_shape=jax.ShapeDtypeStruct((M, hidden), jnp.float32),
        in_specs=[_full_spec(a.shape) for a in args],
        out_specs=_full_spec((M, hidden)),
        scratch_shapes=[pltpu.VMEM((M, hidden), jnp.float32)],
    )(*args)


def _head_kernel(x_ref, num_ref, poolw_ref, poolb_ref, fc1w_ref, fc1b_ref,
                 fc2w_ref, fc2b_ref, o_ref, *, B, S, hidden, n_numeric):
    """Fused BERT pooler + multi-modal MLP head: tanh(cls @ Wp) -> fc1 -> ReLU -> fc2."""
    # CLS rows (token 0 of every sequence): strided sublane read, no gather / transpose.
    cls = x_ref[pl.ds(0, B, stride=S), :]                              # (B, hidden)
    pooled = jnp.tanh(_mm(cls, poolw_ref[...]) + poolb_ref[...])       # (B, hidden)
    # concat([pooled, numeric]) @ fc1  ==  pooled @ fc1[:hidden] + numeric @ fc1[hidden:]
    h = (_mm(pooled, fc1w_ref[0:hidden, :])
         + _mm(num_ref[...], fc1w_ref[hidden:hidden + n_numeric, :])
         + fc1b_ref[...])
    h = jnp.maximum(h, 0.0)
    # TODO(synk): nn.Dropout(0.2) is identity at inference; train-mode RNG masking omitted.
    o_ref[...] = _mm(h, fc2w_ref[...]) + fc2b_ref[...]


def pallas_head(x2, numeric, p, *, B, S, hidden, n_numeric):
    n_out = p["fc2_w"].shape[1]
    args = (
        x2, numeric,
        p["pool_w"], p["pool_b"].reshape(1, hidden),
        p["fc1_w"], p["fc1_b"].reshape(1, -1),
        p["fc2_w"], p["fc2_b"].reshape(1, -1),
    )
    return pl.pallas_call(
        functools.partial(_head_kernel, B=B, S=S, hidden=hidden, n_numeric=n_numeric),
        out_shape=jax.ShapeDtypeStruct((B, n_out), jnp.float32),
        in_specs=[_full_spec(a.shape) for a in args],
        out_specs=_full_spec((B, n_out)),
    )(*args)


# ----------------------------------------------------------------------------- params
def init_params(key, *, vocab=100, max_pos=16, hidden=32, n_layers=2, inter=64,
                n_numeric=4):
    def nrm(k, shape, scale=0.02):
        return (scale * jax.random.normal(k, shape)).astype(jnp.float32)

    ks = iter(jax.random.split(key, 64))
    zeros = lambda n: jnp.zeros((n,), jnp.float32)
    ones = lambda n: jnp.ones((n,), jnp.float32)

    p = dict(
        word_emb=nrm(next(ks), (vocab, hidden)),
        pos_emb=nrm(next(ks), (max_pos, hidden)),
        type_emb=nrm(next(ks), (2, hidden)),
        emb_ln_g=ones(hidden), emb_ln_b=zeros(hidden),
        pool_w=nrm(next(ks), (hidden, hidden)), pool_b=zeros(hidden),
        fc1_w=nrm(next(ks), (hidden + n_numeric, 128)), fc1_b=zeros(128),
        fc2_w=nrm(next(ks), (128, 2)), fc2_b=zeros(2),
        layers=[],
    )
    for _ in range(n_layers):
        p["layers"].append(dict(
            # Q|K|V weights stored pre-concatenated for a single fused projection matmul.
            wqkv=nrm(next(ks), (hidden, 3 * hidden)), bqkv=zeros(3 * hidden),
            wo=nrm(next(ks), (hidden, hidden)), bo=zeros(hidden),
            ln1_g=ones(hidden), ln1_b=zeros(hidden),
            wi=nrm(next(ks), (hidden, inter)), bi=zeros(inter),
            wo2=nrm(next(ks), (inter, hidden)), bo2=zeros(hidden),
            ln2_g=ones(hidden), ln2_b=zeros(hidden),
        ))
    return p


# ----------------------------------------------------------------------------- forward
@functools.partial(jax.jit, static_argnames=("n_heads",))
def multimodal_bert_forward(params, input_ids, attention_mask, numeric_features,
                            *, n_heads=2):
    B, S = input_ids.shape
    hidden = params["word_emb"].shape[1]
    head_dim = hidden // n_heads
    n_numeric = numeric_features.shape[1]

    # --- BERT embeddings: gather/add are XLA glue, LayerNorm is Pallas ---
    x = (params["word_emb"][input_ids]
         + params["pos_emb"][:S][None, :, :]
         + params["type_emb"][0][None, None, :])                 # token_type_ids = 0
    x2 = pallas_layernorm(x.reshape(B * S, hidden),
                          params["emb_ln_g"], params["emb_ln_b"])

    # (B, S) 1/0 mask; the additive -10000 form is regenerated inside each layer kernel.
    mask_f = attention_mask.astype(jnp.float32)

    # --- fused encoder layers: exactly one pallas_call per layer ---
    for lyr in params["layers"]:
        x2 = pallas_encoder_layer(x2, mask_f, lyr,
                                  B=B, S=S, n_heads=n_heads, head_dim=head_dim)

    # --- fused multi-modal head: pooler + [pooled|numeric] @ fc1 + ReLU + fc2 ---
    return pallas_head(x2, numeric_features.astype(jnp.float32), params,
                       B=B, S=S, hidden=hidden, n_numeric=n_numeric)


# ----------------------------------------------------------------------------- main
if __name__ == "__main__":
    B, S, VOCAB, N_NUMERIC = 2, 8, 100, 4

    key = jax.random.PRNGKey(0)
    k_ids, k_num = jax.random.split(key, 2)
    input_ids = jax.random.randint(k_ids, (B, S), 0, VOCAB, dtype=jnp.int32)
    attention_mask = jnp.ones((B, S), dtype=jnp.int32).at[1, 6:].set(0)
    numeric_features = jax.random.normal(k_num, (B, N_NUMERIC), dtype=jnp.float32)

    params = init_params(jax.random.PRNGKey(42), vocab=VOCAB, max_pos=16,
                         hidden=32, n_layers=2, inter=64, n_numeric=N_NUMERIC)

    out = multimodal_bert_forward(params, input_ids, attention_mask,
                                  numeric_features, n_heads=2)
    jax.block_until_ready(out)
    assert out.shape == (B, 2) and out.dtype == jnp.float32
    print("KERNEL_OK")
</pallas_src>

<mosaic_0001>
module attributes {stable_mosaic.version = 11 : i64} {
  func.func @_encoder_layer_kernel(%arg0: memref<16x32xf32, #tpu.memory_space<vmem>>, %arg1: memref<2x8xf32, #tpu.memory_space<vmem>>, %arg2: memref<32x96xf32, #tpu.memory_space<vmem>>, %arg3: memref<1x96xf32, #tpu.memory_space<vmem>>, %arg4: memref<32x32xf32, #tpu.memory_space<vmem>>, %arg5: memref<1x32xf32, #tpu.memory_space<vmem>>, %arg6: memref<1x32xf32, #tpu.memory_space<vmem>>, %arg7: memref<1x32xf32, #tpu.memory_space<vmem>>, %arg8: memref<32x64xf32, #tpu.memory_space<vmem>>, %arg9: memref<1x64xf32, #tpu.memory_space<vmem>>, %arg10: memref<64x32xf32, #tpu.memory_space<vmem>>, %arg11: memref<1x32xf32, #tpu.memory_space<vmem>>, %arg12: memref<1x32xf32, #tpu.memory_space<vmem>>, %arg13: memref<1x32xf32, #tpu.memory_space<vmem>>, %arg14: memref<16x32xf32, #tpu.memory_space<vmem>>, %arg15: memref<16x32xf32, #tpu.memory_space<vmem>>) attributes {dimension_semantics = [], scalar_prefetch = 0 : i64, scratch_operands = 1 : i64, tpu.core_type = #tpu.core_type<tc>} {
    %c0 = arith.constant 0 : index
    %c0_0 = arith.constant 0 : index
    %0 = vector.load %arg0[%c0, %c0_0] : memref<16x32xf32, #tpu.memory_space<vmem>>, vector<16x32xf32>
    %c0_1 = arith.constant 0 : index
    %c0_2 = arith.constant 0 : index
    %1 = vector.load %arg2[%c0_1, %c0_2] : memref<32x96xf32, #tpu.memory_space<vmem>>, vector<32x96xf32>
    %2 = arith.truncf %0 : vector<16x32xf32> to vector<16x32xbf16>
    %3 = arith.truncf %1 : vector<32x96xf32> to vector<32x96xbf16>
    %cst = arith.constant dense<0.000000e+00> : vector<16x96xf32>
    %4 = tpu.matmul %2, %3, %cst {dimension_numbers = #tpu.dot_dimension_numbers<[1], [0], [0], [1], [0, 0, 1, 1], [], []>} : vector<16x32xbf16>, vector<32x96xbf16>, vector<16x96xf32> -> vector<16x96xf32>
    %c0_3 = arith.constant 0 : index
    %c0_4 = arith.constant 0 : index
    %5 = vector.load %arg3[%c0_3, %c0_4] : memref<1x96xf32, #tpu.memory_space<vmem>>, vector<1x96xf32>
    %6 = vector.broadcast %5 : vector<1x96xf32> to vector<16x96xf32>
    %7 = arith.addf %4, %6 : vector<16x96xf32>
    %8 = vector.extract_strided_slice %7 {offsets = [0, 0], sizes = [16, 32], strides = [1, 1]} : vector<16x96xf32> to vector<16x32xf32>
    %9 = vector.extract_strided_slice %7 {offsets = [0, 32], sizes = [16, 32], strides = [1, 1]} : vector<16x96xf32> to vector<16x32xf32>
    %10 = vector.extract_strided_slice %7 {offsets = [0, 64], sizes = [16, 32], strides = [1, 1]} : vector<16x96xf32> to vector<16x32xf32>
    %c0_5 = arith.constant 0 : index
    %c0_6 = arith.constant 0 : index
    %11 = vector.load %arg1[%c0_5, %c0_6] : memref<2x8xf32, #tpu.memory_space<vmem>>, vector<1x8xf32>
    %cst_7 = arith.constant 1.000000e+00 : f32
    %12 = vector.broadcast %cst_7 : f32 to vector<1x8xf32>
    %13 = arith.subf %12, %11 : vector<1x8xf32>
    %cst_8 = arith.constant -1.000000e+04 : f32
    %14 = vector.broadcast %cst_8 : f32 to vector<1x8xf32>
    %15 = arith.mulf %13, %14 : vector<1x8xf32>
    %16 = vector.extract_strided_slice %8 {offsets = [0, 0], sizes = [8, 16], strides = [1, 1]} : vector<16x32xf32> to vector<8x16xf32>
    %17 = vector.extract_strided_slice %9 {offsets = [0, 0], sizes = [8, 16], strides = [1, 1]} : vector<16x32xf32> to vector<8x16xf32>
    %18 = vector.extract_strided_slice %10 {offsets = [0, 0], sizes = [8, 16], strides = [1, 1]} : vector<16x32xf32> to vector<8x16xf32>
    %19 = arith.truncf %16 : vector<8x16xf32> to vector<8x16xbf16>
    %20 = arith.truncf %17 : vector<8x16xf32> to vector<8x16xbf16>
    %cst_9 = arith.constant dense<0.000000e+00> : vector<8x8xf32>
    %21 = tpu.matmul %19, %20, %cst_9 {dimension_numbers = #tpu.dot_dimension_numbers<[1], [1], [0], [0], [0, 0, 1, 0], [], []>} : vector<8x16xbf16>, vector<8x16xbf16>, vector<8x8xf32> -> vector<8x8xf32>
    %cst_10 = arith.constant 2.500000e-01 : f32
    %22 = vector.broadcast %cst_10 : f32 to vector<8x8xf32>
    %23 = arith.mulf %21, %22 : vector<8x8xf32>
    %24 = vector.broadcast %15 : vector<1x8xf32> to vector<8x8xf32>
    %25 = arith.addf %23, %24 : vector<8x8xf32>
    %cst_11 = arith.constant dense<0xFF800000> : vector<8xf32>
    %26 = vector.multi_reduction <maximumf>, %25, %cst_11 [1] : vector<8x8xf32> to vector<8xf32>
    %27 = vector.shape_cast %26 : vector<8xf32> to vector<8x1xf32>
    %28 = vector.broadcast %27 : vector<8x1xf32> to vector<8x8xf32>
    %29 = arith.subf %25, %28 : vector<8x8xf32>
    %30 = math.exp %29 : vector<8x8xf32>
    %cst_12 = arith.constant dense<0.000000e+00> : vector<8xf32>
    %31 = vector.multi_reduction <add>, %30, %cst_12 [1] : vector<8x8xf32> to vector<8xf32>
    %32 = vector.shape_cast %31 : vector<8xf32> to vector<8x1xf32>
    %33 = tpu.reciprocal %32 {approx = true} : vector<8x1xf32> -> vector<8x1xf32>
    %34 = vector.broadcast %33 : vector<8x1xf32> to vector<8x8xf32>
    %35 = arith.mulf %30, %34 : vector<8x8xf32>
    %36 = arith.truncf %35 : vector<8x8xf32> to vector<8x8xbf16>
    %37 = arith.truncf %18 : vector<8x16xf32> to vector<8x16xbf16>
    %cst_13 = arith.constant dense<0.000000e+00> : vector<8x16xf32>
    %38 = tpu.matmul %36, %37, %cst_13 {dimension_numbers = #tpu.dot_dimension_numbers<[1], [0], [0], [1], [0, 0, 1, 1], [], []>} : vector<8x8xbf16>, vector<8x16xbf16>, vector<8x16xf32> -> vector<8x16xf32>
    %c0_14 = arith.constant 0 : index
    %c0_15 = arith.constant 0 : index
    %39 = vector.load %arg15[%c0_14, %c0_15] : memref<16x32xf32, #tpu.memory_space<vmem>>, vector<8x16xf32>
    tpu.vector_store %arg15[%c0_14, %c0_15], %38 {strides = array<i32>} : memref<16x32xf32, #tpu.memory_space<vmem>>, vector<8x16xf32>,
    %40 = vector.extract_strided_slice %8 {offsets = [0, 16], sizes = [8, 16], strides = [1, 1]} : vector<16x32xf32> to vector<8x16xf32>
    %41 = vector.extract_strided_slice %9 {offsets = [0, 16], sizes = [8, 16], strides = [1, 1]} : vector<16x32xf32> to vector<8x16xf32>
    %42 = vector.extract_strided_slice %10 {offsets = [0, 16], sizes = [8, 16], strides = [1, 1]} : vector<16x32xf32> to vector<8x16xf32>
    %43 = arith.truncf %40 : vector<8x16xf32> to vector<8x16xbf16>
    %44 = arith.truncf %41 : vector<8x16xf32> to vector<8x16xbf16>
    %cst_16 = arith.constant dense<0.000000e+00> : vector<8x8xf32>
    %45 = tpu.matmul %43, %44, %cst_16 {dimension_numbers = #tpu.dot_dimension_numbers<[1], [1], [0], [0], [0, 0, 1, 0], [], []>} : vector<8x16xbf16>, vector<8x16xbf16>, vector<8x8xf32> -> vector<8x8xf32>
    %cst_17 = arith.constant 2.500000e-01 : f32
    %46 = vector.broadcast %cst_17 : f32 to vector<8x8xf32>
    %47 = arith.mulf %45, %46 : vector<8x8xf32>
    %48 = vector.broadcast %15 : vector<1x8xf32> to vector<8x8xf32>
    %49 = arith.addf %47, %48 : vector<8x8xf32>
    %cst_18 = arith.constant dense<0xFF800000> : vector<8xf32>
    %50 = vector.multi_reduction <maximumf>, %49, %cst_18 [1] : vector<8x8xf32> to vector<8xf32>
    %51 = vector.shape_cast %50 : vector<8xf32> to vector<8x1xf32>
    %52 = vector.broadcast %51 : vector<8x1xf32> to vector<8x8xf32>
    %53 = arith.subf %49, %52 : vector<8x8xf32>
    %54 = math.exp %53 : vector<8x8xf32>
    %cst_19 = arith.constant dense<0.000000e+00> : vector<8xf32>
    %55 = vector.multi_reduction <add>, %54, %cst_19 [1] : vector<8x8xf32> to vector<8xf32>
    %56 = vector.shape_cast %55 : vector<8xf32> to vector<8x1xf32>
    %57 = tpu.reciprocal %56 {approx = true} : vector<8x1xf32> -> vector<8x1xf32>
    %58 = vector.broadcast %57 : vector<8x1xf32> to vector<8x8xf32>
    %59 = arith.mulf %54, %58 : vector<8x8xf32>
    %60 = arith.truncf %59 : vector<8x8xf32> to vector<8x8xbf16>
    %61 = arith.truncf %42 : vector<8x16xf32> to vector<8x16xbf16>
    %cst_20 = arith.constant dense<0.000000e+00> : vector<8x16xf32>
    %62 = tpu.matmul %60, %61, %cst_20 {dimension_numbers = #tpu.dot_dimension_numbers<[1], [0], [0], [1], [0, 0, 1, 1], [], []>} : vector<8x8xbf16>, vector<8x16xbf16>, vector<8x16xf32> -> vector<8x16xf32>
    %c0_21 = arith.constant 0 : index
    %c16 = arith.constant 16 : index
    %63 = vector.load %arg15[%c0_21, %c16] : memref<16x32xf32, #tpu.memory_space<vmem>>, vector<8x16xf32>
    tpu.vector_store %arg15[%c0_21, %c16], %62 {strides = array<i32>} : memref<16x32xf32, #tpu.memory_space<vmem>>, vector<8x16xf32>,
    %c1 = arith.constant 1 : index
    %c0_22 = arith.constant 0 : index
    %64 = vector.load %arg1[%c1, %c0_22] : memref<2x8xf32, #tpu.memory_space<vmem>>, vector<1x8xf32>
    %cst_23 = arith.constant 1.000000e+00 : f32
    %65 = vector.broadcast %cst_23 : f32 to vector<1x8xf32>
    %66 = arith.subf %65, %64 : vector<1x8xf32>
    %cst_24 = arith.constant -1.000000e+04 : f32
    %67 = vector.broadcast %cst_24 : f32 to vector<1x8xf32>
    %68 = arith.mulf %66, %67 : vector<1x8xf32>
    %69 = vector.extract_strided_slice %8 {offsets = [8, 0], sizes = [8, 16], strides = [1, 1]} : vector<16x32xf32> to vector<8x16xf32>
    %70 = vector.extract_strided_slice %9 {offsets = [8, 0], sizes = [8, 16], strides = [1, 1]} : vector<16x32xf32> to vector<8x16xf32>
    %71 = vector.extract_strided_slice %10 {offsets = [8, 0], sizes = [8, 16], strides = [1, 1]} : vector<16x32xf32> to vector<8x16xf32>
    %72 = arith.truncf %69 : vector<8x16xf32> to vector<8x16xbf16>
    %73 = arith.truncf %70 : vector<8x16xf32> to vector<8x16xbf16>
    %cst_25 = arith.constant dense<0.000000e+00> : vector<8x8xf32>
    %74 = tpu.matmul %72, %73, %cst_25 {dimension_numbers = #tpu.dot_dimension_numbers<[1], [1], [0], [0], [0, 0, 1, 0], [], []>} : vector<8x16xbf16>, vector<8x16xbf16>, vector<8x8xf32> -> vector<8x8xf32>
    %cst_26 = arith.constant 2.500000e-01 : f32
    %75 = vector.broadcast %cst_26 : f32 to vector<8x8xf32>
    %76 = arith.mulf %74, %75 : vector<8x8xf32>
    %77 = vector.broadcast %68 : vector<1x8xf32> to vector<8x8xf32>
    %78 = arith.addf %76, %77 : vector<8x8xf32>
    %cst_27 = arith.constant dense<0xFF800000> : vector<8xf32>
    %79 = vector.multi_reduction <maximumf>, %78, %cst_27 [1] : vector<8x8xf32> to vector<8xf32>
    %80 = vector.shape_cast %79 : vector<8xf32> to vector<8x1xf32>
    %81 = vector.broadcast %80 : vector<8x1xf32> to vector<8x8xf32>
    %82 = arith.subf %78, %81 : vector<8x8xf32>
    %83 = math.exp %82 : vector<8x8xf32>
    %cst_28 = arith.constant dense<0.000000e+00> : vector<8xf32>
    %84 = vector.multi_reduction <add>, %83, %cst_28 [1] : vector<8x8xf32> to vector<8xf32>
    %85 = vector.shape_cast %84 : vector<8xf32> to vector<8x1xf32>
    %86 = tpu.reciprocal %85 {approx = true} : vector<8x1xf32> -> vector<8x1xf32>
    %87 = vector.broadcast %86 : vector<8x1xf32> to vector<8x8xf32>
    %88 = arith.mulf %83, %87 : vector<8x8xf32>
    %89 = arith.truncf %88 : vector<8x8xf32> to vector<8x8xbf16>
    %90 = arith.truncf %71 : vector<8x16xf32> to vector<8x16xbf16>
    %cst_29 = arith.constant dense<0.000000e+00> : vector<8x16xf32>
    %91 = tpu.matmul %89, %90, %cst_29 {dimension_numbers = #tpu.dot_dimension_numbers<[1], [0], [0], [1], [0, 0, 1, 1], [], []>} : vector<8x8xbf16>, vector<8x16xbf16>, vector<8x16xf32> -> vector<8x16xf32>
    %c8 = arith.constant 8 : index
    %c0_30 = arith.constant 0 : index
    %92 = vector.load %arg15[%c8, %c0_30] : memref<16x32xf32, #tpu.memory_space<vmem>>, vector<8x16xf32>
    tpu.vector_store %arg15[%c8, %c0_30], %91 {strides = array<i32>} : memref<16x32xf32, #tpu.memory_space<vmem>>, vector<8x16xf32>,
    %93 = vector.extract_strided_slice %8 {offsets = [8, 16], sizes = [8, 16], strides = [1, 1]} : vector<16x32xf32> to vector<8x16xf32>
    %94 = vector.extract_strided_slice %9 {offsets = [8, 16], sizes = [8, 16], strides = [1, 1]} : vector<16x32xf32> to vector<8x16xf32>
    %95 = vector.extract_strided_slice %10 {offsets = [8, 16], sizes = [8, 16], strides = [1, 1]} : vector<16x32xf32> to vector<8x16xf32>
    %96 = arith.truncf %93 : vector<8x16xf32> to vector<8x16xbf16>
    %97 = arith.truncf %94 : vector<8x16xf32> to vector<8x16xbf16>
    %cst_31 = arith.constant dense<0.000000e+00> : vector<8x8xf32>
    %98 = tpu.matmul %96, %97, %cst_31 {dimension_numbers = #tpu.dot_dimension_numbers<[1], [1], [0], [0], [0, 0, 1, 0], [], []>} : vector<8x16xbf16>, vector<8x16xbf16>, vector<8x8xf32> -> vector<8x8xf32>
    %cst_32 = arith.constant 2.500000e-01 : f32
    %99 = vector.broadcast %cst_32 : f32 to vector<8x8xf32>
    %100 = arith.mulf %98, %99 : vector<8x8xf32>
    %101 = vector.broadcast %68 : vector<1x8xf32> to vector<8x8xf32>
    %102 = arith.addf %100, %101 : vector<8x8xf32>
    %cst_33 = arith.constant dense<0xFF800000> : vector<8xf32>
    %103 = vector.multi_reduction <maximumf>, %102, %cst_33 [1] : vector<8x8xf32> to vector<8xf32>
    %104 = vector.shape_cast %103 : vector<8xf32> to vector<8x1xf32>
    %105 = vector.broadcast %104 : vector<8x1xf32> to vector<8x8xf32>
    %106 = arith.subf %102, %105 : vector<8x8xf32>
    %107 = math.exp %106 : vector<8x8xf32>
    %cst_34 = arith.constant dense<0.000000e+00> : vector<8xf32>
    %108 = vector.multi_reduction <add>, %107, %cst_34 [1] : vector<8x8xf32> to vector<8xf32>
    %109 = vector.shape_cast %108 : vector<8xf32> to vector<8x1xf32>
    %110 = tpu.reciprocal %109 {approx = true} : vector<8x1xf32> -> vector<8x1xf32>
    %111 = vector.broadcast %110 : vector<8x1xf32> to vector<8x8xf32>
    %112 = arith.mulf %107, %111 : vector<8x8xf32>
    %113 = arith.truncf %112 : vector<8x8xf32> to vector<8x8xbf16>
    %114 = arith.truncf %95 : vector<8x16xf32> to vector<8x16xbf16>
    %cst_35 = arith.constant dense<0.000000e+00> : vector<8x16xf32>
    %115 = tpu.matmul %113, %114, %cst_35 {dimension_numbers = #tpu.dot_dimension_numbers<[1], [0], [0], [1], [0, 0, 1, 1], [], []>} : vector<8x8xbf16>, vector<8x16xbf16>, vector<8x16xf32> -> vector<8x16xf32>
    %c8_36 = arith.constant 8 : index
    %c16_37 = arith.constant 16 : index
    %116 = vector.load %arg15[%c8_36, %c16_37] : memref<16x32xf32, #tpu.memory_space<vmem>>, vector<8x16xf32>
    tpu.vector_store %arg15[%c8_36, %c16_37], %115 {strides = array<i32>} : memref<16x32xf32, #tpu.memory_space<vmem>>, vector<8x16xf32>,
    %c0_38 = arith.constant 0 : index
    %c0_39 = arith.constant 0 : index
    %117 = vector.load %arg15[%c0_38, %c0_39] : memref<16x32xf32, #tpu.memory_space<vmem>>, vector<16x32xf32>
    %c0_40 = arith.constant 0 : index
    %c0_41 = arith.constant 0 : index
    %118 = vector.load %arg4[%c0_40, %c0_41] : memref<32x32xf32, #tpu.memory_space<vmem>>, vector<32x32xf32>
    %119 = arith.truncf %117 : vector<16x32xf32> to vector<16x32xbf16>
    %120 = arith.truncf %118 : vector<32x32xf32> to vector<32x32xbf16>
    %cst_42 = arith.constant dense<0.000000e+00> : vector<16x32xf32>
    %121 = tpu.matmul %119, %120, %cst_42 {dimension_numbers = #tpu.dot_dimension_numbers<[1], [0], [0], [1], [0, 0, 1, 1], [], []>} : vector<16x32xbf16>, vector<32x32xbf16>, vector<16x32xf32> -> vector<16x32xf32>
    %c0_43 = arith.constant 0 : index
    %c0_44 = arith.constant 0 : index
    %122 = vector.load %arg5[%c0_43, %c0_44] : memref<1x32xf32, #tpu.memory_space<vmem>>, vector<1x32xf32>
    %123 = vector.broadcast %122 : vector<1x32xf32> to vector<16x32xf32>
    %124 = arith.addf %121, %123 : vector<16x32xf32>
    %125 = arith.addf %124, %0 : vector<16x32xf32>
    %c0_45 = arith.constant 0 : index
    %c0_46 = arith.constant 0 : index
    %126 = vector.load %arg6[%c0_45, %c0_46] : memref<1x32xf32, #tpu.memory_space<vmem>>, vector<1x32xf32>
    %c0_47 = arith.constant 0 : index
    %c0_48 = arith.constant 0 : index
    %127 = vector.load %arg7[%c0_47, %c0_48] : memref<1x32xf32, #tpu.memory_space<vmem>>, vector<1x32xf32>
    %cst_49 = arith.constant dense<0.000000e+00> : vector<16xf32>
    %128 = vector.multi_reduction <add>, %125, %cst_49 [1] : vector<16x32xf32> to vector<16xf32>
    %129 = vector.shape_cast %128 : vector<16xf32> to vector<16x1xf32>
    %cst_50 = arith.constant 3.200000e+01 : f32
    %130 = vector.broadcast %cst_50 : f32 to vector<16x1xf32>
    %131 = arith.divf %129, %130 : vector<16x1xf32>
    %132 = vector.broadcast %131 : vector<16x1xf32> to vector<16x32xf32>
    %133 = arith.subf %125, %132 : vector<16x32xf32>
    %134 = arith.mulf %133, %133 : vector<16x32xf32>
    %cst_51 = arith.constant dense<0.000000e+00> : vector<16xf32>
    %135 = vector.multi_reduction <add>, %134, %cst_51 [1] : vector<16x32xf32> to vector<16xf32>
    %136 = vector.shape_cast %135 : vector<16xf32> to vector<16x1xf32>
    %cst_52 = arith.constant 3.200000e+01 : f32
    %137 = vector.broadcast %cst_52 : f32 to vector<16x1xf32>
    %138 = arith.divf %136, %137 : vector<16x1xf32>
    %139 = vector.broadcast %131 : vector<16x1xf32> to vector<16x32xf32>
    %140 = arith.subf %125, %139 : vector<16x32xf32>
    %cst_53 = arith.constant 9.99999996E-13 : f32
    %141 = vector.broadcast %cst_53 : f32 to vector<16x1xf32>
    %142 = arith.addf %138, %141 : vector<16x1xf32>
    %143 = math.rsqrt %142 : vector<16x1xf32>
    %144 = vector.broadcast %143 : vector<16x1xf32> to vector<16x32xf32>
    %145 = arith.mulf %140, %144 : vector<16x32xf32>
    %146 = vector.broadcast %126 : vector<1x32xf32> to vector<16x32xf32>
    %147 = arith.mulf %145, %146 : vector<16x32xf32>
    %148 = vector.broadcast %127 : vector<1x32xf32> to vector<16x32xf32>
    %149 = arith.addf %147, %148 : vector<16x32xf32>
    %c0_54 = arith.constant 0 : index
    %c0_55 = arith.constant 0 : index
    %150 = vector.load %arg8[%c0_54, %c0_55] : memref<32x64xf32, #tpu.memory_space<vmem>>, vector<32x64xf32>
    %151 = arith.truncf %149 : vector<16x32xf32> to vector<16x32xbf16>
    %152 = arith.truncf %150 : vector<32x64xf32> to vector<32x64xbf16>
    %cst_56 = arith.constant dense<0.000000e+00> : vector<16x64xf32>
    %153 = tpu.matmul %151, %152, %cst_56 {dimension_numbers = #tpu.dot_dimension_numbers<[1], [0], [0], [1], [0, 0, 1, 1], [], []>} : vector<16x32xbf16>, vector<32x64xbf16>, vector<16x64xf32> -> vector<16x64xf32>
    %c0_57 = arith.constant 0 : index
    %c0_58 = arith.constant 0 : index
    %154 = vector.load %arg9[%c0_57, %c0_58] : memref<1x64xf32, #tpu.memory_space<vmem>>, vector<1x64xf32>
    %155 = vector.broadcast %154 : vector<1x64xf32> to vector<16x64xf32>
    %156 = arith.addf %153, %155 : vector<16x64xf32>
    %cst_59 = arith.constant 5.000000e-01 : f32
    %157 = vector.broadcast %cst_59 : f32 to vector<16x64xf32>
    %158 = arith.mulf %157, %156 : vector<16x64xf32>
    %cst_60 = arith.constant 4.471500e-02 : f32
    %159 = vector.broadcast %cst_60 : f32 to vector<16x64xf32>
    %160 = arith.mulf %159, %156 : vector<16x64xf32>
    %161 = arith.mulf %160, %156 : vector<16x64xf32>
    %162 = arith.mulf %161, %156 : vector<16x64xf32>
    %163 = arith.addf %156, %162 : vector<16x64xf32>
    %cst_61 = arith.constant 0.797884583 : f32
    %164 = vector.broadcast %cst_61 : f32 to vector<16x64xf32>
    %165 = arith.mulf %164, %163 : vector<16x64xf32>
    %166 = math.tanh %165 : vector<16x64xf32>
    %cst_62 = arith.constant 1.000000e+00 : f32
    %167 = vector.broadcast %cst_62 : f32 to vector<16x64xf32>
    %168 = arith.addf %167, %166 : vector<16x64xf32>
    %169 = arith.mulf %158, %168 : vector<16x64xf32>
    %c0_63 = arith.constant 0 : index
    %c0_64 = arith.constant 0 : index
    %170 = vector.load %arg10[%c0_63, %c0_64] : memref<64x32xf32, #tpu.memory_space<vmem>>, vector<64x32xf32>
    %171 = arith.truncf %169 : vector<16x64xf32> to vector<16x64xbf16>
    %172 = arith.truncf %170 : vector<64x32xf32> to vector<64x32xbf16>
    %cst_65 = arith.constant dense<0.000000e+00> : vector<16x32xf32>
    %173 = tpu.matmul %171, %172, %cst_65 {dimension_numbers = #tpu.dot_dimension_numbers<[1], [0], [0], [1], [0, 0, 1, 1], [], []>} : vector<16x64xbf16>, vector<64x32xbf16>, vector<16x32xf32> -> vector<16x32xf32>
    %c0_66 = arith.constant 0 : index
    %c0_67 = arith.constant 0 : index
    %174 = vector.load %arg11[%c0_66, %c0_67] : memref<1x32xf32, #tpu.memory_space<vmem>>, vector<1x32xf32>
    %175 = vector.broadcast %174 : vector<1x32xf32> to vector<16x32xf32>
    %176 = arith.addf %173, %175 : vector<16x32xf32>
    %177 = arith.addf %176, %149 : vector<16x32xf32>
    %c0_68 = arith.constant 0 : index
    %c0_69 = arith.constant 0 : index
    %178 = vector.load %arg12[%c0_68, %c0_69] : memref<1x32xf32, #tpu.memory_space<vmem>>, vector<1x32xf32>
    %c0_70 = arith.constant 0 : index
    %c0_71 = arith.constant 0 : index
    %179 = vector.load %arg13[%c0_70, %c0_71] : memref<1x32xf32, #tpu.memory_space<vmem>>, vector<1x32xf32>
    %cst_72 = arith.constant dense<0.000000e+00> : vector<16xf32>
    %180 = vector.multi_reduction <add>, %177, %cst_72 [1] : vector<16x32xf32> to vector<16xf32>
    %181 = vector.shape_cast %180 : vector<16xf32> to vector<16x1xf32>
    %cst_73 = arith.constant 3.200000e+01 : f32
    %182 = vector.broadcast %cst_73 : f32 to vector<16x1xf32>
    %183 = arith.divf %181, %182 : vector<16x1xf32>
    %184 = vector.broadcast %183 : vector<16x1xf32> to vector<16x32xf32>
    %185 = arith.subf %177, %184 : vector<16x32xf32>
    %186 = arith.mulf %185, %185 : vector<16x32xf32>
    %cst_74 = arith.constant dense<0.000000e+00> : vector<16xf32>
    %187 = vector.multi_reduction <add>, %186, %cst_74 [1] : vector<16x32xf32> to vector<16xf32>
    %188 = vector.shape_cast %187 : vector<16xf32> to vector<16x1xf32>
    %cst_75 = arith.constant 3.200000e+01 : f32
    %189 = vector.broadcast %cst_75 : f32 to vector<16x1xf32>
    %190 = arith.divf %188, %189 : vector<16x1xf32>
    %191 = vector.broadcast %183 : vector<16x1xf32> to vector<16x32xf32>
    %192 = arith.subf %177, %191 : vector<16x32xf32>
    %cst_76 = arith.constant 9.99999996E-13 : f32
    %193 = vector.broadcast %cst_76 : f32 to vector<16x1xf32>
    %194 = arith.addf %190, %193 : vector<16x1xf32>
    %195 = math.rsqrt %194 : vector<16x1xf32>
    %196 = vector.broadcast %195 : vector<16x1xf32> to vector<16x32xf32>
    %197 = arith.mulf %192, %196 : vector<16x32xf32>
    %198 = vector.broadcast %178 : vector<1x32xf32> to vector<16x32xf32>
    %199 = arith.mulf %197, %198 : vector<16x32xf32>
    %200 = vector.broadcast %179 : vector<1x32xf32> to vector<16x32xf32>
    %201 = arith.addf %199, %200 : vector<16x32xf32>
    %c0_77 = arith.constant 0 : index
    %c0_78 = arith.constant 0 : index
    %202 = vector.load %arg14[%c0_77, %c0_78] : memref<16x32xf32, #tpu.memory_space<vmem>>, vector<16x32xf32>
    tpu.vector_store %arg14[%c0_77, %c0_78], %201 {strides = array<i32>} : memref<16x32xf32, #tpu.memory_space<vmem>>, vector<16x32xf32>,
    return
  }
}

module attributes {stable_mosaic.version = 11 : i64} {
  func.func @_layernorm_kernel(%arg0: memref<16x32xf32, #tpu.memory_space<vmem>>, %arg1: memref<1x32xf32, #tpu.memory_space<vmem>>, %arg2: memref<1x32xf32, #tpu.memory_space<vmem>>, %arg3: memref<16x32xf32, #tpu.memory_space<vmem>>) attributes {dimension_semantics = [], scalar_prefetch = 0 : i64, scratch_operands = 0 : i64, tpu.core_type = #tpu.core_type<tc>} {
    %c0 = arith.constant 0 : index
    %c0_0 = arith.constant 0 : index
    %0 = vector.load %arg0[%c0, %c0_0] : memref<16x32xf32, #tpu.memory_space<vmem>>, vector<16x32xf32>
    %c0_1 = arith.constant 0 : index
    %c0_2 = arith.constant 0 : index
    %1 = vector.load %arg1[%c0_1, %c0_2] : memref<1x32xf32, #tpu.memory_space<vmem>>, vector<1x32xf32>
    %c0_3 = arith.constant 0 : index
    %c0_4 = arith.constant 0 : index
    %2 = vector.load %arg2[%c0_3, %c0_4] : memref<1x32xf32, #tpu.memory_space<vmem>>, vector<1x32xf32>
    %cst = arith.constant dense<0.000000e+00> : vector<16xf32>
    %3 = vector.multi_reduction <add>, %0, %cst [1] : vector<16x32xf32> to vector<16xf32>
    %4 = vector.shape_cast %3 : vector<16xf32> to vector<16x1xf32>
    %cst_5 = arith.constant 3.200000e+01 : f32
    %5 = vector.broadcast %cst_5 : f32 to vector<16x1xf32>
    %6 = arith.divf %4, %5 : vector<16x1xf32>
    %7 = vector.broadcast %6 : vector<16x1xf32> to vector<16x32xf32>
    %8 = arith.subf %0, %7 : vector<16x32xf32>
    %9 = arith.mulf %8, %8 : vector<16x32xf32>
    %cst_6 = arith.constant dense<0.000000e+00> : vector<16xf32>
    %10 = vector.multi_reduction <add>, %9, %cst_6 [1] : vector<16x32xf32> to vector<16xf32>
    %11 = vector.shape_cast %10 : vector<16xf32> to vector<16x1xf32>
    %cst_7 = arith.constant 3.200000e+01 : f32
    %12 = vector.broadcast %cst_7 : f32 to vector<16x1xf32>
    %13 = arith.divf %11, %12 : vector<16x1xf32>
    %14 = vector.broadcast %6 : vector<16x1xf32> to vector<16x32xf32>
    %15 = arith.subf %0, %14 : vector<16x32xf32>
    %cst_8 = arith.constant 9.99999996E-13 : f32
    %16 = vector.broadcast %cst_8 : f32 to vector<16x1xf32>
    %17 = arith.addf %13, %16 : vector<16x1xf32>
    %18 = math.rsqrt %17 : vector<16x1xf32>
    %19 = vector.broadcast %18 : vector<16x1xf32> to vector<16x32xf32>
    %20 = arith.mulf %15, %19 : vector<16x32xf32>
    %21 = vector.broadcast %1 : vector<1x32xf32> to vector<16x32xf32>
    %22 = arith.mulf %20, %21 : vector<16x32xf32>
    %23 = vector.broadcast %2 : vector<1x32xf32> to vector<16x32xf32>
    %24 = arith.addf %22, %23 : vector<16x32xf32>
    %c0_9 = arith.constant 0 : index
    %c0_10 = arith.constant 0 : index
    %25 = vector.load %arg3[%c0_9, %c0_10] : memref<16x32xf32, #tpu.memory_space<vmem>>, vector<16x32xf32>
    tpu.vector_store %arg3[%c0_9, %c0_10], %24 {strides = array<i32>} : memref<16x32xf32, #tpu.memory_space<vmem>>, vector<16x32xf32>,
    return
  }
}

module attributes {stable_mosaic.version = 11 : i64} {
  func.func @_head_kernel(%arg0: memref<16x32xf32, #tpu.memory_space<vmem>>, %arg1: memref<2x4xf32, #tpu.memory_space<vmem>>, %arg2: memref<32x32xf32, #tpu.memory_space<vmem>>, %arg3: memref<1x32xf32, #tpu.memory_space<vmem>>, %arg4: memref<36x128xf32, #tpu.memory_space<vmem>>, %arg5: memref<1x128xf32, #tpu.memory_space<vmem>>, %arg6: memref<128x2xf32, #tpu.memory_space<vmem>>, %arg7: memref<1x2xf32, #tpu.memory_space<vmem>>, %arg8: memref<2x2xf32, #tpu.memory_space<vmem>>) attributes {dimension_semantics = [], scalar_prefetch = 0 : i64, scratch_operands = 0 : i64, tpu.core_type = #tpu.core_type<tc>} {
    %c0 = arith.constant 0 : index
    %c0_0 = arith.constant 0 : index
    %0 = tpu.strided_load %arg0[%c0, %c0_0] {strides = array<i32: 8, 1>} : memref<16x32xf32, #tpu.memory_space<vmem>>, vector<2x32xf32>
    %c0_1 = arith.constant 0 : index
    %c0_2 = arith.constant 0 : index
    %1 = vector.load %arg2[%c0_1, %c0_2] : memref<32x32xf32, #tpu.memory_space<vmem>>, vector<32x32xf32>
    %2 = arith.truncf %0 : vector<2x32xf32> to vector<2x32xbf16>
    %3 = arith.truncf %1 : vector<32x32xf32> to vector<32x32xbf16>
    %cst = arith.constant dense<0.000000e+00> : vector<2x32xf32>
    %4 = tpu.matmul %2, %3, %cst {dimension_numbers = #tpu.dot_dimension_numbers<[1], [0], [0], [1], [0, 0, 1, 1], [], []>} : vector<2x32xbf16>, vector<32x32xbf16>, vector<2x32xf32> -> vector<2x32xf32>
    %c0_3 = arith.constant 0 : index
    %c0_4 = arith.constant 0 : index
    %5 = vector.load %arg3[%c0_3, %c0_4] : memref<1x32xf32, #tpu.memory_space<vmem>>, vector<1x32xf32>
    %6 = vector.broadcast %5 : vector<1x32xf32> to vector<2x32xf32>
    %7 = arith.addf %4, %6 : vector<2x32xf32>
    %8 = math.tanh %7 : vector<2x32xf32>
    %c0_5 = arith.constant 0 : index
    %c0_6 = arith.constant 0 : index
    %9 = vector.load %arg4[%c0_5, %c0_6] : memref<36x128xf32, #tpu.memory_space<vmem>>, vector<32x128xf32>
    %10 = arith.truncf %8 : vector<2x32xf32> to vector<2x32xbf16>
    %11 = arith.truncf %9 : vector<32x128xf32> to vector<32x128xbf16>
    %cst_7 = arith.constant dense<0.000000e+00> : vector<2x128xf32>
    %12 = tpu.matmul %10, %11, %cst_7 {dimension_numbers = #tpu.dot_dimension_numbers<[1], [0], [0], [1], [0, 0, 1, 1], [], []>} : vector<2x32xbf16>, vector<32x128xbf16>, vector<2x128xf32> -> vector<2x128xf32>
    %c0_8 = arith.constant 0 : index
    %c0_9 = arith.constant 0 : index
    %13 = vector.load %arg1[%c0_8, %c0_9] : memref<2x4xf32, #tpu.memory_space<vmem>>, vector<2x4xf32>
    %c32 = arith.constant 32 : index
    %c0_10 = arith.constant 0 : index
    %14 = vector.load %arg4[%c32, %c0_10] : memref<36x128xf32, #tpu.memory_space<vmem>>, vector<4x128xf32>
    %15 = arith.truncf %13 : vector<2x4xf32> to vector<2x4xbf16>
    %16 = arith.truncf %14 : vector<4x128xf32> to vector<4x128xbf16>
    %cst_11 = arith.constant dense<0.000000e+00> : vector<2x128xf32>
    %17 = tpu.matmul %15, %16, %cst_11 {dimension_numbers = #tpu.dot_dimension_numbers<[1], [0], [0], [1], [0, 0, 1, 1], [], []>} : vector<2x4xbf16>, vector<4x128xbf16>, vector<2x128xf32> -> vector<2x128xf32>
    %18 = arith.addf %12, %17 : vector<2x128xf32>
    %c0_12 = arith.constant 0 : index
    %c0_13 = arith.constant 0 : index
    %19 = vector.load %arg5[%c0_12, %c0_13] : memref<1x128xf32, #tpu.memory_space<vmem>>, vector<1x128xf32>
    %20 = vector.broadcast %19 : vector<1x128xf32> to vector<2x128xf32>
    %21 = arith.addf %18, %20 : vector<2x128xf32>
    %cst_14 = arith.constant 0.000000e+00 : f32
    %22 = vector.broadcast %cst_14 : f32 to vector<2x128xf32>
    %23 = arith.maximumf %21, %22 : vector<2x128xf32>
    %c0_15 = arith.constant 0 : index
    %c0_16 = arith.constant 0 : index
    %24 = vector.load %arg6[%c0_15, %c0_16] : memref<128x2xf32, #tpu.memory_space<vmem>>, vector<128x2xf32>
    %25 = arith.truncf %23 : vector<2x128xf32> to vector<2x128xbf16>
    %26 = arith.truncf %24 : vector<128x2xf32> to vector<128x2xbf16>
    %cst_17 = arith.constant dense<0.000000e+00> : vector<2x2xf32>
    %27 = tpu.matmul %25, %26, %cst_17 {dimension_numbers = #tpu.dot_dimension_numbers<[1], [0], [0], [1], [0, 0, 1, 1], [], []>} : vector<2x128xbf16>, vector<128x2xbf16>, vector<2x2xf32> -> vector<2x2xf32>
    %c0_18 = arith.constant 0 : index
    %c0_19 = arith.constant 0 : index
    %28 = vector.load %arg7[%c0_18, %c0_19] : memref<1x2xf32, #tpu.memory_space<vmem>>, vector<1x2xf32>
    %29 = vector.broadcast %28 : vector<1x2xf32> to vector<2x2xf32>
    %30 = arith.addf %27, %29 : vector<2x2xf32>
    %c0_20 = arith.constant 0 : index
    %c0_21 = arith.constant 0 : index
    %31 = vector.load %arg8[%c0_20, %c0_21] : memref<2x2xf32, #tpu.memory_space<vmem>>, vector<2x2xf32>
    tpu.vector_store %arg8[%c0_20, %c0_21], %30 {strides = array<i32>} : memref<2x2xf32, #tpu.memory_space<vmem>>, vector<2x2xf32>,
    return
  }
}

</mosaic_0001>

<llo_original>
// kernel: multimodal_bert_forward.4
$region0: #{multimodal_bert_forward.4}
  #allocation0 [shape = 'u32[]', space=smem, size = 0x4, offset = 0x4, fixed_abs, tag = 'smem constant byte address 0x4 - core index']
  #allocation1 [shape = 'u32[144,128]{1,0:T(1,128)}', space=vmem, size = 0x12000, scoped, tag = 'internal scratch']
  %s0 = inlined_call_operand.vmem [shape: f32[16,32], index: 0, kind: input, shape index: {}]
  %s1 = inlined_call_operand.vmem [shape: f32[1,32], index: 1, kind: input, shape index: {}]
  %s2 = inlined_call_operand.vmem [shape: f32[1,32], index: 2, kind: input, shape index: {}]
  %s3 = inlined_call_operand.vmem [shape: f32[16,32], index: 3, kind: output, shape index: {}]
  %s4 = sld [smem:[#allocation0]]
  $region22: #{multimodal_bert_forward.4} parent=0
    _
  %s6 = ssub.s32 1, %s4
  %s7 = scalar_select 0, %s6, %s4
  // Predicated region
  $region2: #{multimodal_bert_forward.4} parent=0 // pred_check
    _
  $region3: #{multimodal_bert_forward.4} parent=0 // pred_check_branch
    %9 = sbr.rel (0) target = $region5
  $region4: #{multimodal_bert_forward.4} parent=0 // pred_region
    _
  $region5: #{multimodal_bert_forward.4} parent=0 // pred_fallthru
    _
  // Predicated region
  $region6: #{multimodal_bert_forward.4} parent=0 // pred_check
    _
  $region7: #{multimodal_bert_forward.4} parent=0 // pred_check_branch
    %11 = sbr.rel (0) target = $region9
  $region8: #{multimodal_bert_forward.4} parent=0 // pred_region
    _
  $region9: #{multimodal_bert_forward.4} parent=0 // pred_fallthru
    _
  // Predicated region
  $region10: #{multimodal_bert_forward.4} parent=0 // pred_check
    _
  $region11: #{multimodal_bert_forward.4} parent=0 // pred_check_branch
    %13 = sbr.rel (0) target = $region13
  $region12: #{multimodal_bert_forward.4} parent=0 // pred_region
    _
  $region13: #{multimodal_bert_forward.4} parent=0 // pred_fallthru
    _
  %v14 = vld [vmem:[%s0] sm:$0xff]
  %v15 = vld [vmem:[%s0 + $0x8] sm:$0xff]
  %v16 = vld [vmem:[%s1] sm:$0x1]
  %v17 = vld [vmem:[%s2] sm:$0x1]
  %vm18 = vcmask 261120
  %v19 = vsel %vm18, %v14, 0.0
  %20 = vadd.xlane.f32.xlu0 %v19
  %v21 = vpop.xlane.xlu0 %20
  %v22 = vsel %vm18, %v15, 0.0
  %23 = vadd.xlane.f32.xlu0 %v22
  %v24 = vpop.xlane.xlu0 %23
  %v25 = vrcp.pop 32.0
  %v26 = vmul.f32 %v21, %v25
  %v27 = vmul.f32 %v24, %v25
  %v28 = vsub.f32 %v14, %v26
  %v29 = vsub.f32 %v15, %v27
  %v30 = vmul.f32 %v28, %v28
  %v31 = vmul.f32 %v29, %v29
  %v32 = vsel %vm18, %v30, 0.0
  %33 = vadd.xlane.f32.xlu0 %v32
  %v34 = vpop.xlane.xlu0 %33
  %v35 = vsel %vm18, %v31, 0.0
  %36 = vadd.xlane.f32.xlu0 %v35
  %v37 = vpop.xlane.xlu0 %36
  %v38 = vmul.f32 %v34, %v25
  %v39 = vmul.f32 %v37, %v25
  %v40 = vadd.f32 %v38, 1e-12
  %v41 = vadd.f32 %v39, 1e-12
  %v42 = vrsqrt.pop %v40
  %v43 = vrsqrt.pop %v41
  %v44 = vmul.f32 %v28, %v42
  %v45 = vmul.f32 %v29, %v43
  %v47 = vlaneseq
  %v48 = vshrl.u32 %v47, 7
  %v49 = vsub.s32 0, %v48
  %v50 = vrot.slane %v16, %v49
  %v52 = vmul.f32 %v44, %v50
  %v53 = vmul.f32 %v45, %v50
  %v55 = vlaneseq
  %v56 = vshrl.u32 %v55, 7
  %v57 = vsub.s32 0, %v56
  %v58 = vrot.slane %v17, %v57
  %v60 = vadd.f32 %v52, %v58
  %v61 = vadd.f32 %v53, %v58
  %62 = vst.msk [vmem:[%s3] sm:$0xff] %vm18, %v60
  %63 = vst.msk [vmem:[%s3 + $0x8] sm:$0xff] %vm18, %v61
  // Predicated region
  $region14: #{multimodal_bert_forward.4} parent=0 // pred_check
    _
  $region15: #{multimodal_bert_forward.4} parent=0 // pred_check_branch
    %65 = sbr.rel (0) target = $region17
  $region16: #{multimodal_bert_forward.4} parent=0 // pred_region
    _
  $region17: #{multimodal_bert_forward.4} parent=0 // pred_fallthru
    _
  // Predicated region
  $region18: #{multimodal_bert_forward.4} parent=0 // pred_check
    _
  $region19: #{multimodal_bert_forward.4} parent=0 // pred_check_branch
    %67 = sbr.rel (0) target = $region21
  $region20: #{multimodal_bert_forward.4} parent=0 // pred_region
    _
  $region21: #{multimodal_bert_forward.4} parent=0 // pred_fallthru
    _

// kernel: multimodal_bert_forward.7
$region0: #{multimodal_bert_forward.7}
  #allocation0 [shape = 'u32[]', space=smem, size = 0x4, offset = 0x4, fixed_abs, tag = 'smem constant byte address 0x4 - core index']
  #allocation1 [shape = 'u32[144,128]{1,0:T(1,128)}', space=vmem, size = 0x12000, scoped, tag = 'internal scratch']
  %s0 = inlined_call_operand.vmem [shape: f32[16,32], index: 0, kind: input, shape index: {}]
  %s1 = inlined_call_operand.vmem [shape: f32[2,4], index: 1, kind: input, shape index: {}]
  %s2 = inlined_call_operand.vmem [shape: f32[32,32], index: 2, kind: input, shape index: {}]
  %s3 = inlined_call_operand.vmem [shape: f32[1,32], index: 3, kind: input, shape index: {}]
  %s4 = inlined_call_operand.vmem [shape: f32[36,128], index: 4, kind: input, shape index: {}]
  %s5 = inlined_call_operand.vmem [shape: f32[1,128], index: 5, kind: input, shape index: {}]
  %s6 = inlined_call_operand.vmem [shape: f32[128,2], index: 6, kind: input, shape index: {}]
  %s7 = inlined_call_operand.vmem [shape: f32[1,2], index: 7, kind: input, shape index: {}]
  %s8 = inlined_call_operand.hbm [shape: f32[2,2], index: 8, kind: output, shape index: {}]
  %s9 = sld [smem:[#allocation0]]
  $region42: #{multimodal_bert_forward.7} parent=0
    _
  %s11 = ssub.s32 1, %s9
  %s12 = scalar_select 0, %s11, %s9
  $region1: #{multimodal_bert_forward.7} parent=0
    #allocation2 [shape = 'u8[1024]{0}', space=vmem, size = 0x400, scoped, tag = 'output window, operand 0, single buffered']
    #allocation3 [shape = 's32[1]{0}', space=sflag, size = 0x4, scoped, tag = 'scoped memory for multimodal_bert_forward.7']
    %13 = vsyncpa [#allocation3], 0
    // Predicated region
    $region2: #{multimodal_bert_forward.7} parent=1 // pred_check
      _
    $region3: #{multimodal_bert_forward.7} parent=1 // pred_check_branch
      %15 = sbr.rel (0) target = $region5
    $region4: #{multimodal_bert_forward.7} parent=1 // pred_region
      _
    $region5: #{multimodal_bert_forward.7} parent=1 // pred_fallthru
      _
    // Predicated region
    $region6: #{multimodal_bert_forward.7} parent=1 // pred_check
      _
    $region7: #{multimodal_bert_forward.7} parent=1 // pred_check_branch
      %17 = sbr.rel (0) target = $region9
    $region8: #{multimodal_bert_forward.7} parent=1 // pred_region
      _
    $region9: #{multimodal_bert_forward.7} parent=1 // pred_fallthru
      _
    // Predicated region
    $region10: #{multimodal_bert_forward.7} parent=1 // pred_check
      _
    $region11: #{multimodal_bert_forward.7} parent=1 // pred_check_branch
      %19 = sbr.rel (0) target = $region13
    $region12: #{multimodal_bert_forward.7} parent=1 // pred_region
      _
    $region13: #{multimodal_bert_forward.7} parent=1 // pred_fallthru
      _
    // Predicated region
    $region14: #{multimodal_bert_forward.7} parent=1 // pred_check
      _
    $region15: #{multimodal_bert_forward.7} parent=1 // pred_check_branch
      %21 = sbr.rel (0) target = $region17
    $region16: #{multimodal_bert_forward.7} parent=1 // pred_region
      _
    $region17: #{multimodal_bert_forward.7} parent=1 // pred_fallthru
      _
    // Predicated region
    $region18: #{multimodal_bert_forward.7} parent=1 // pred_check
      _
    $region19: #{multimodal_bert_forward.7} parent=1 // pred_check_branch
      %23 = sbr.rel (0) target = $region21
    $region20: #{multimodal_bert_forward.7} parent=1 // pred_region
      _
    $region21: #{multimodal_bert_forward.7} parent=1 // pred_fallthru
      _
    // Predicated region
    $region22: #{multimodal_bert_forward.7} parent=1 // pred_check
      _
    $region23: #{multimodal_bert_forward.7} parent=1 // pred_check_branch
      %25 = sbr.rel (0) target = $region25
    $region24: #{multimodal_bert_forward.7} parent=1 // pred_region
      _
    $region25: #{multimodal_bert_forward.7} parent=1 // pred_fallthru
      _
    // Predicated region
    $region26: #{multimodal_bert_forward.7} parent=1 // pred_check
      _
    $region27: #{multimodal_bert_forward.7} parent=1 // pred_check_branch
      %27 = sbr.rel (0) target = $region29
    $region28: #{multimodal_bert_forward.7} parent=1 // pred_region
      _
    $region29: #{multimodal_bert_forward.7} parent=1 // pred_fallthru
      _
    // Predicated region
    $region30: #{multimodal_bert_forward.7} parent=1 // pred_check
      _
    $region31: #{multimodal_bert_forward.7} parent=1 // pred_check_branch
      %29 = sbr.rel (0) target = $region33
    $region32: #{multimodal_bert_forward.7} parent=1 // pred_region
      _
    $region33: #{multimodal_bert_forward.7} parent=1 // pred_fallthru
      _
    %v31 = vld [vmem:[%s0] ss:$8 sm:$0x3]
    %v32 = vld [vmem:[%s2] sm:$0xff]
    %v33 = vld [vmem:[%s2 + $0x8] sm:$0xff]
    %v34 = vld [vmem:[%s2 + $0x10] sm:$0xff]
    %v35 = vld [vmem:[%s2 + $0x18] sm:$0xff]
    %v36 = vpack.c.bf16 %v31, %v31
    %v37 = vpack.c.bf16 %v33, %v32
    %v38 = vpack.c.bf16 %v35, %v34
    %v39 = vld [vmem:[%s3] sm:$0x1]
    %v41 = vlaneseq
    %v42 = vshrl.u32 %v41, 7
    %v43 = vsub.s32 0, %v42
    %v44 = vrot.slane %v39, %v43
    %vm46 = vcmask 261120
    %v48 = vsel %vm46, %v36, 0
    %50 = vmatprep.subr.bf16.mxu0 0
    %51 = vmatpush1.bf16.msra.mxu0 0
    %52 = vmatprep.subr.bf16.mxu0 0
    %53 = vmatpush1.bf16.msra.mxu0 0
    %54 = vmatprep.subr.bf16.mxu0 0
    %55 = vmatpush1.bf16.msra.mxu0 0
    %56 = vmatprep.subr.bf16.mxu0 0
    %57 = vmatpush1.bf16.msra.mxu0 0
    %58 = vmatprep.subr.bf16.mxu0 0
    %59 = vmatpush1.bf16.msra.mxu0 0
    %60 = vmatprep.subr.bf16.mxu0 0
    %61 = vmatpush1.bf16.msra.mxu0 0
    %62 = vmatprep.subr.bf16.mxu0 0
    %63 = vmatpush1.bf16.msra.mxu0 %v38
    %64 = vmatprep.subr.bf16.mxu0 0
    %65 = vmatpush1.bf16.msra.mxu0 %v37
    %66 = vmatprep.subr.bf16.mxu0 0
    %67 = vmatpush2.bf16.msra.mxu0 0
    %68 = vmatprep.subr.bf16.mxu0 0
    %69 = vmatpush2.bf16.msra.mxu0 0
    %70 = vmatprep.subr.bf16.mxu0 0
    %71 = vmatpush2.bf16.msra.mxu0 0
    %72 = vmatprep.subr.bf16.mxu0 0
    %73 = vmatpush2.bf16.msra.mxu0 0
    %74 = vmatprep.subr.bf16.mxu0 0
    %75 = vmatpush2.bf16.msra.mxu0 0
    %76 = vmatprep.subr.bf16.mxu0 0
    %77 = vmatpush2.bf16.msra.mxu0 0
    %78 = vmatprep.subr.bf16.mxu0 0
    %79 = vmatpush2.bf16.msra.mxu0 0
    %80 = vmatprep.subr.bf16.mxu0 0
    %81 = vmatpush2.bf16.msra.mxu0 0
    %82 = vmatprep.mubr.bf16.mxu0 0
    %83 = vmatmul.mubr.bf16.gmra.mxu0 %v48
    %v84 = vpop.f32.mrf.mxu0
    %v85 = vadd.f32 %v44, %v84
    %v86 = vpop.f32.mrf.mxu0
    %v87 = vpop.f32.mrf.mxu0
    %v88 = vpop.f32.mrf.mxu0
    %89 = vdwg.mxu0
    %v90 = vtanh.pop %v85
    %v91 = vld [vmem:[%s4] sm:$0xff]
    %v92 = vld [vmem:[%s4 + $0x8] sm:$0xff]
    %v93 = vld [vmem:[%s4 + $0x10] sm:$0xff]
    %v94 = vld [vmem:[%s4 + $0x18] sm:$0xff]
    %v95 = vpack.c.bf16 %v90, %v90
    %v96 = vpack.c.bf16 %v92, %v91
    %v97 = vpack.c.bf16 %v94, %v93
    %v98 = vld [vmem:[%s1] sm:$0x3]
    %v99 = vld [vmem:[%s4 + $0x20] sm:$0xf]
    %v100 = vpack.c.bf16 %v98, %v98
    %v101 = vpack.c.bf16 %v99, %v99
    %vm102 = vcmask 31744
    %v104 = vsel %vm102, %v100, 0
    %vm106 = vcmask 1041408
    %v108 = vsel %vm106, %v101, 0
    %110 = vmatprep.subr.bf16.mxu0 0
    %111 = vmatpush1.bf16.msra.mxu0 0
    %112 = vmatprep.subr.bf16.mxu0 0
    %113 = vmatpush1.bf16.msra.mxu0 0
    %114 = vmatprep.subr.bf16.mxu0 0
    %115 = vmatpush1.bf16.msra.mxu0 0
    %116 = vmatprep.subr.bf16.mxu0 0
    %117 = vmatpush1.bf16.msra.mxu0 0
    %118 = vmatprep.subr.bf16.mxu0 0
    %119 = vmatpush1.bf16.msra.mxu0 0
    %120 = vmatprep.subr.bf16.mxu0 0
    %121 = vmatpush1.bf16.msra.mxu0 0
    %122 = vmatprep.subr.bf16.mxu0 0
    %123 = vmatpush1.bf16.msra.mxu0 0
    %124 = vmatprep.subr.bf16.mxu0 0
    %125 = vmatpush1.bf16.msra.mxu0 %v108
    %126 = vmatprep.subr.bf16.mxu0 0
    %127 = vmatpush2.bf16.msra.mxu0 0
    %128 = vmatprep.subr.bf16.mxu0 0
    %129 = vmatpush2.bf16.msra.mxu0 0
    %130 = vmatprep.subr.bf16.mxu0 0
    %131 = vmatpush2.bf16.msra.mxu0 0
    %132 = vmatprep.subr.bf16.mxu0 0
    %133 = vmatpush2.bf16.msra.mxu0 0
    %134 = vmatprep.subr.bf16.mxu0 0
    %135 = vmatpush2.bf16.msra.mxu0 0
    %136 = vmatprep.subr.bf16.mxu0 0
    %137 = vmatpush2.bf16.msra.mxu0 0
    %138 = vmatprep.subr.bf16.mxu0 0
    %139 = vmatpush2.bf16.msra.mxu0 0
    %140 = vmatprep.subr.bf16.mxu0 0
    %141 = vmatpush2.bf16.msra.mxu0 0
    %142 = vmatprep.mubr.bf16.mxu0 0
    %143 = vmatmul.mubr.bf16.gmra.mxu0 %v104
    %v144 = vpop.f32.mrf.mxu0
    %v145 = vadd.f32 0.0, %v144
    %v146 = vpop.f32.mrf.mxu0
    %v147 = vpop.f32.mrf.mxu0
    %v148 = vpop.f32.mrf.mxu0
    %149 = vdwg.mxu0
    %v151 = vsel %vm46, %v95, 0
    %153 = vmatprep.subr.bf16.mxu0 0
    %154 = vmatpush1.bf16.msra.mxu0 0
    %155 = vmatprep.subr.bf16.mxu0 0
    %156 = vmatpush1.bf16.msra.mxu0 0
    %157 = vmatprep.subr.bf16.mxu0 0
    %158 = vmatpush1.bf16.msra.mxu0 0
    %159 = vmatprep.subr.bf16.mxu0 0
    %160 = vmatpush1.bf16.msra.mxu0 0
    %161 = vmatprep.subr.bf16.mxu0 0
    %162 = vmatpush1.bf16.msra.mxu0 0
    %163 = vmatprep.subr.bf16.mxu0 0
    %164 = vmatpush1.bf16.msra.mxu0 0
    %165 = vmatprep.subr.bf16.mxu0 0
    %166 = vmatpush1.bf16.msra.mxu0 %v97
    %167 = vmatprep.subr.bf16.mxu0 0
    %168 = vmatpush1.bf16.msra.mxu0 %v96
    %169 = vmatprep.subr.bf16.mxu0 0
    %170 = vmatpush2.bf16.msra.mxu0 0
    %171 = vmatprep.subr.bf16.mxu0 0
    %172 = vmatpush2.bf16.msra.mxu0 0
    %173 = vmatprep.subr.bf16.mxu0 0
    %174 = vmatpush2.bf16.msra.mxu0 0
    %175 = vmatprep.subr.bf16.mxu0 0
    %176 = vmatpush2.bf16.msra.mxu0 0
    %177 = vmatprep.subr.bf16.mxu0 0
    %178 = vmatpush2.bf16.msra.mxu0 0
    %179 = vmatprep.subr.bf16.mxu0 0
    %180 = vmatpush2.bf16.msra.mxu0 0
    %181 = vmatprep.subr.bf16.mxu0 0
    %182 = vmatpush2.bf16.msra.mxu0 0
    %183 = vmatprep.subr.bf16.mxu0 0
    %184 = vmatpush2.bf16.msra.mxu0 0
    %185 = vmatprep.mubr.bf16.mxu0 0
    %186 = vmatmul.mubr.bf16.gmra.mxu0 %v151
    %v187 = vpop.f32.mrf.mxu0
    %v188 = vadd.f32 %v145, %v187
    %v189 = vpop.f32.mrf.mxu0
    %v190 = vpop.f32.mrf.mxu0
    %v191 = vpop.f32.mrf.mxu0
    %192 = vdwg.mxu0
    %v193 = vld [vmem:[%s5] sm:$0x1]
    %v195 = vlaneseq
    %v196 = vshrl.u32 %v195, 7
    %v197 = vsub.s32 0, %v196
    %v198 = vrot.slane %v193, %v197
    %v200 = vadd.f32 %v188, %v198
    %v201 = vmax.f32 %v200, 0.0
    %v202 = vld [vmem:[%s6] sm:$0xff]
    %v203 = vld [vmem:[%s6 + $0x8] sm:$0xff]
    %v204 = vld [vmem:[%s6 + $0x10] sm:$0xff]
    %v205 = vld [vmem:[%s6 + $0x18] sm:$0xff]
    %v206 = vld [vmem:[%s6 + $0x20] sm:$0xff]
    %v207 = vld [vmem:[%s6 + $0x28] sm:$0xff]
    %v208 = vld [vmem:[%s6 + $0x30] sm:$0xff]
    %v209 = vld [vmem:[%s6 + $0x38] sm:$0xff]
    %v210 = vld [vmem:[%s6 + $0x40] sm:$0xff]
    %v211 = vld [vmem:[%s6 + $0x48] sm:$0xff]
    %v212 = vld [vmem:[%s6 + $0x50] sm:$0xff]
    %v213 = vld [vmem:[%s6 + $0x58] sm:$0xff]
    %v214 = vld [vmem:[%s6 + $0x60] sm:$0xff]
    %v215 = vld [vmem:[%s6 + $0x68] sm:$0xff]
    %v216 = vld [vmem:[%s6 + $0x70] sm:$0xff]
    %v217 = vld [vmem:[%s6 + $0x78] sm:$0xff]
    %v218 = vpack.c.bf16 %v201, %v201
    %v219 = vpack.c.bf16 %v203, %v202
    %v220 = vpack.c.bf16 %v205, %v204
    %v221 = vpack.c.bf16 %v207, %v206
    %v222 = vpack.c.bf16 %v209, %v208
    %v223 = vpack.c.bf16 %v211, %v210
    %v224 = vpack.c.bf16 %v213, %v212
    %v225 = vpack.c.bf16 %v215, %v214
    %v226 = vpack.c.bf16 %v217, %v216
    %v227 = vld [vmem:[%s7] sm:$0x1]
    %v229 = vlaneseq
    %v230 = vshrl.u32 %v229, 7
    %v231 = vsub.s32 0, %v230
    %v232 = vrot.slane %v227, %v231
    %234 = vmatprep.subr.bf16.mxu0 0
    %235 = vmatpush1.bf16.msra.mxu0 %v226
    %236 = vmatprep.subr.bf16.mxu0 0
    %237 = vmatpush1.bf16.msra.mxu0 %v225
    %238 = vmatprep.subr.bf16.mxu0 0
    %239 = vmatpush1.bf16.msra.mxu0 %v224
    %240 = vmatprep.subr.bf16.mxu0 0
    %241 = vmatpush1.bf16.msra.mxu0 %v223
    %242 = vmatprep.subr.bf16.mxu0 0
    %243 = vmatpush1.bf16.msra.mxu0 %v222
    %244 = vmatprep.subr.bf16.mxu0 0
    %245 = vmatpush1.bf16.msra.mxu0 %v221
    %246 = vmatprep.subr.bf16.mxu0 0
    %247 = vmatpush1.bf16.msra.mxu0 %v220
    %248 = vmatprep.subr.bf16.mxu0 0
    %249 = vmatpush1.bf16.msra.mxu0 %v219
    %250 = vmatprep.subr.bf16.mxu0 0
    %251 = vmatpush2.bf16.msra.mxu0 0
    %252 = vmatprep.subr.bf16.mxu0 0
    %253 = vmatpush2.bf16.msra.mxu0 0
    %254 = vmatprep.subr.bf16.mxu0 0
    %255 = vmatpush2.bf16.msra.mxu0 0
    %256 = vmatprep.subr.bf16.mxu0 0
    %257 = vmatpush2.bf16.msra.mxu0 0
    %258 = vmatprep.subr.bf16.mxu0 0
    %259 = vmatpush2.bf16.msra.mxu0 0
    %260 = vmatprep.subr.bf16.mxu0 0
    %261 = vmatpush2.bf16.msra.mxu0 0
    %262 = vmatprep.subr.bf16.mxu0 0
    %263 = vmatpush2.bf16.msra.mxu0 0
    %264 = vmatprep.subr.bf16.mxu0 0
    %265 = vmatpush2.bf16.msra.mxu0 0
    %266 = vmatprep.mubr.bf16.mxu0 0
    %267 = vmatmul.mubr.bf16.gmra.mxu0 %v218
    %v268 = vpop.f32.mrf.mxu0
    %v269 = vadd.f32 %v232, %v268
    %v270 = vpop.f32.mrf.mxu0
    %v271 = vpop.f32.mrf.mxu0
    %v272 = vpop.f32.mrf.mxu0
    %273 = vdwg.mxu0
    %vm274 = vcmask 9216
    %275 = vst.msk [vmem:[#allocation2] sm:$0x3] %vm274, %v269
    // Predicated region
    $region34: #{multimodal_bert_forward.7} parent=1 // pred_check
      _
    $region35: #{multimodal_bert_forward.7} parent=1 // pred_check_branch
      %277 = sbr.rel (0) target = $region37
    $region36: #{multimodal_bert_forward.7} parent=1 // pred_region
      %s279 = ssub.s32 32, 32
      %280 = vsyncadd [#allocation3], %s279
      %s282 = sshll.u32 [#allocation2], 4
      %s283 = int_to_ptr.vmem [resolvable:$true] %s282
      %285 = dma.vmem_to_hbm [thread:$0]  %s283, 32, %s8, [#allocation3]
    $region37: #{multimodal_bert_forward.7} parent=1 // pred_fallthru
      _
    // Predicated region
    $region38: #{multimodal_bert_forward.7} parent=1 // pred_check
      _
    $region39: #{multimodal_bert_forward.7} parent=1 // pred_check_branch
      %287 = sbr.rel (0) target = $region41
    $region40: #{multimodal_bert_forward.7} parent=1 // pred_region
      %288 = dma.done [#allocation3], 32
    $region41: #{multimodal_bert_forward.7} parent=1 // pred_fallthru
      _
    %289 = vsyncpa [#allocation3], 1

// kernel: multimodal_bert_forward.5
$region0: #{multimodal_bert_forward.5}
  #allocation0 [shape = 'u32[]', space=smem, size = 0x4, offset = 0x4, fixed_abs, tag = 'smem constant byte address 0x4 - core index']
  #allocation1 [shape = 'u32[144,128]{1,0:T(1,128)}', space=vmem, size = 0x12000, scoped, tag = 'internal scratch']
  #allocation2 [shape = 'f32[16,32]{1,0:T(8,128)}', space=vmem, size = 0x2000, scoped, tag = 'scratch operand']
  %s0 = inlined_call_operand.vmem [shape: f32[16,32], index: 0, kind: input, shape index: {}]
  %s1 = inlined_call_operand.vmem [shape: f32[2,8], index: 1, kind: input, shape index: {}]
  %s2 = inlined_call_operand.vmem [shape: f32[32,96], index: 2, kind: input, shape index: {}]
  %s3 = inlined_call_operand.vmem [shape: f32[1,96], index: 3, kind: input, shape index: {}]
  %s4 = inlined_call_operand.vmem [shape: f32[32,32], index: 4, kind: input, shape index: {}]
  %s5 = inlined_call_operand.vmem [shape: f32[1,32], index: 5, kind: input, shape index: {}]
  %s6 = inlined_call_operand.vmem [shape: f32[1,32], index: 6, kind: input, shape index: {}]
  %s7 = inlined_call_operand.vmem [shape: f32[1,32], index: 7, kind: input, shape index: {}]
  %s8 = inlined_call_operand.vmem [shape: f32[32,64], index: 8, kind: input, shape index: {}]
  %s9 = inlined_call_operand.vmem [shape: f32[1,64], index: 9, kind: input, shape index: {}]
  %s10 = inlined_call_operand.vmem [shape: f32[64,32], index: 10, kind: input, shape index: {}]
  %s11 = inlined_call_operand.vmem [shape: f32[1,32], index: 11, kind: input, shape index: {}]
  %s12 = inlined_call_operand.vmem [shape: f32[1,32], index: 12, kind: input, shape index: {}]
  %s13 = inlined_call_operand.vmem [shape: f32[1,32], index: 13, kind: input, shape index: {}]
  %s14 = inlined_call_operand.vmem [shape: f32[16,32], index: 14, kind: output, shape index: {}]
  %s15 = sld [smem:[#allocation0]]
  $region66: #{multimodal_bert_forward.5} parent=0
    _
  %s17 = ssub.s32 1, %s15
  %s18 = scalar_select 0, %s17, %s15
  // Predicated region
  $region2: #{multimodal_bert_forward.5} parent=0 // pred_check
    _
  $region3: #{multimodal_bert_forward.5} parent=0 // pred_check_branch
    %20 = sbr.rel (0) target = $region5
  $region4: #{multimodal_bert_forward.5} parent=0 // pred_region
    _
  $region5: #{multimodal_bert_forward.5} parent=0 // pred_fallthru
    _
  // Predicated region
  $region6: #{multimodal_bert_forward.5} parent=0 // pred_check
    _
  $region7: #{multimodal_bert_forward.5} parent=0 // pred_check_branch
    %22 = sbr.rel (0) target = $region9
  $region8: #{multimodal_bert_forward.5} parent=0 // pred_region
    _
  $region9: #{multimodal_bert_forward.5} parent=0 // pred_fallthru
    _
  // Predicated region
  $region10: #{multimodal_bert_forward.5} parent=0 // pred_check
    _
  $region11: #{multimodal_bert_forward.5} parent=0 // pred_check_branch
    %24 = sbr.rel (0) target = $region13
  $region12: #{multimodal_bert_forward.5} parent=0 // pred_region
    _
  $region13: #{multimodal_bert_forward.5} parent=0 // pred_fallthru
    _
  // Predicated region
  $region14: #{multimodal_bert_forward.5} parent=0 // pred_check
    _
  $region15: #{multimodal_bert_forward.5} parent=0 // pred_check_branch
    %26 = sbr.rel (0) target = $region17
  $region16: #{multimodal_bert_forward.5} parent=0 // pred_region
    _
  $region17: #{multimodal_bert_forward.5} parent=0 // pred_fallthru
    _
  // Predicated region
  $region18: #{multimodal_bert_forward.5} parent=0 // pred_check
    _
  $region19: #{multimodal_bert_forward.5} parent=0 // pred_check_branch
    %28 = sbr.rel (0) target = $region21
  $region20: #{multimodal_bert_forward.5} parent=0 // pred_region
    _
  $region21: #{multimodal_bert_forward.5} parent=0 // pred_fallthru
    _
  // Predicated region
  $region22: #{multimodal_bert_forward.5} parent=0 // pred_check
    _
  $region23: #{multimodal_bert_forward.5} parent=0 // pred_check_branch
    %30 = sbr.rel (0) target = $region25
  $region24: #{multimodal_bert_forward.5} parent=0 // pred_region
    _
  $region25: #{multimodal_bert_forward.5} parent=0 // pred_fallthru
    _
  // Predicated region
  $region26: #{multimodal_bert_forward.5} parent=0 // pred_check
    _
  $region27: #{multimodal_bert_forward.5} parent=0 // pred_check_branch
    %32 = sbr.rel (0) target = $region29
  $region28: #{multimodal_bert_forward.5} parent=0 // pred_region
    _
  $region29: #{multimodal_bert_forward.5} parent=0 // pred_fallthru
    _
  // Predicated region
  $region30: #{multimodal_bert_forward.5} parent=0 // pred_check
    _
  $region31: #{multimodal_bert_forward.5} parent=0 // pred_check_branch
    %34 = sbr.rel (0) target = $region33
  $region32: #{multimodal_bert_forward.5} parent=0 // pred_region
    _
  $region33: #{multimodal_bert_forward.5} parent=0 // pred_fallthru
    _
  // Predicated region
  $region34: #{multimodal_bert_forward.5} parent=0 // pred_check
    _
  $region35: #{multimodal_bert_forward.5} parent=0 // pred_check_branch
    %36 = sbr.rel (0) target = $region37
  $region36: #{multimodal_bert_forward.5} parent=0 // pred_region
    _
  $region37: #{multimodal_bert_forward.5} parent=0 // pred_fallthru
    _
  // Predicated region
  $region38: #{multimodal_bert_forward.5} parent=0 // pred_check
    _
  $region39: #{multimodal_bert_forward.5} parent=0 // pred_check_branch
    %38 = sbr.rel (0) target = $region41
  $region40: #{multimodal_bert_forward.5} parent=0 // pred_region
    _
  $region41: #{multimodal_bert_forward.5} parent=0 // pred_fallthru
    _
  // Predicated region
  $region42: #{multimodal_bert_forward.5} parent=0 // pred_check
    _
  $region43: #{multimodal_bert_forward.5} parent=0 // pred_check_branch
    %40 = sbr.rel (0) target = $region45
  $region44: #{multimodal_bert_forward.5} parent=0 // pred_region
    _
  $region45: #{multimodal_bert_forward.5} parent=0 // pred_fallthru
    _
  // Predicated region
  $region46: #{multimodal_bert_forward.5} parent=0 // pred_check
    _
  $region47: #{multimodal_bert_forward.5} parent=0 // pred_check_branch
    %42 = sbr.rel (0) target = $region49
  $region48: #{multimodal_bert_forward.5} parent=0 // pred_region
    _
  $region49: #{multimodal_bert_forward.5} parent=0 // pred_fallthru
    _
  // Predicated region
  $region50: #{multimodal_bert_forward.5} parent=0 // pred_check
    _
  $region51: #{multimodal_bert_forward.5} parent=0 // pred_check_branch
    %44 = sbr.rel (0) target = $region53
  $region52: #{multimodal_bert_forward.5} parent=0 // pred_region
    _
  $region53: #{multimodal_bert_forward.5} parent=0 // pred_fallthru
    _
  // Predicated region
  $region54: #{multimodal_bert_forward.5} parent=0 // pred_check
    _
  $region55: #{multimodal_bert_forward.5} parent=0 // pred_check_branch
    %46 = sbr.rel (0) target = $region57
  $region56: #{multimodal_bert_forward.5} parent=0 // pred_region
    _
  $region57: #{multimodal_bert_forward.5} parent=0 // pred_fallthru
    _
  %v48 = vld [vmem:[%s0] sm:$0xff]
  %v49 = vld [vmem:[%s0 + $0x8] sm:$0xff]
  %v50 = vld [vmem:[%s2] sm:$0xff]
  %v51 = vld [vmem:[%s2 + $0x8] sm:$0xff]
  %v52 = vld [vmem:[%s2 + $0x10] sm:$0xff]
  %v53 = vld [vmem:[%s2 + $0x18] sm:$0xff]
  %v54 = vpack.c.bf16 %v49, %v48
  %v55 = vpack.c.bf16 %v51, %v50
  %v56 = vpack.c.bf16 %v53, %v52
  %v57 = vld [vmem:[%s3] sm:$0x1]
  %v59 = vlaneseq
  %v60 = vshrl.u32 %v59, 7
  %v61 = vsub.s32 0, %v60
  %v62 = vrot.slane %v57, %v61
  %vm64 = vcmask 261120
  %v66 = vsel %vm64, %v54, 0
  %68 = vmatprep.subr.bf16.mxu0 0
  %69 = vmatpush1.bf16.msra.mxu0 0
  %70 = vmatprep.subr.bf16.mxu0 0
  %71 = vmatpush1.bf16.msra.mxu0 0
  %72 = vmatprep.subr.bf16.mxu0 0
  %73 = vmatpush1.bf16.msra.mxu0 0
  %74 = vmatprep.subr.bf16.mxu0 0
  %75 = vmatpush1.bf16.msra.mxu0 0
  %76 = vmatprep.subr.bf16.mxu0 0
  %77 = vmatpush1.bf16.msra.mxu0 0
  %78 = vmatprep.subr.bf16.mxu0 0
  %79 = vmatpush1.bf16.msra.mxu0 0
  %80 = vmatprep.subr.bf16.mxu0 0
  %81 = vmatpush1.bf16.msra.mxu0 %v56
  %82 = vmatprep.subr.bf16.mxu0 0
  %83 = vmatpush1.bf16.msra.mxu0 %v55
  %84 = vmatprep.subr.bf16.mxu0 0
  %85 = vmatpush2.bf16.msra.mxu0 0
  %86 = vmatprep.subr.bf16.mxu0 0
  %87 = vmatpush2.bf16.msra.mxu0 0
  %88 = vmatprep.subr.bf16.mxu0 0
  %89 = vmatpush2.bf16.msra.mxu0 0
  %90 = vmatprep.subr.bf16.mxu0 0
  %91 = vmatpush2.bf16.msra.mxu0 0
  %92 = vmatprep.subr.bf16.mxu0 0
  %93 = vmatpush2.bf16.msra.mxu0 0
  %94 = vmatprep.subr.bf16.mxu0 0
  %95 = vmatpush2.bf16.msra.mxu0 0
  %96 = vmatprep.subr.bf16.mxu0 0
  %97 = vmatpush2.bf16.msra.mxu0 0
  %98 = vmatprep.subr.bf16.mxu0 0
  %99 = vmatpush2.bf16.msra.mxu0 0
  %100 = vmatprep.mubr.bf16.mxu0 0
  %101 = vmatmul.mubr.bf16.gmra.mxu0 %v66
  %v102 = vpop.f32.mrf.mxu0
  %v103 = vadd.f32 %v62, %v102
  %v104 = vpop.f32.mrf.mxu0
  %v105 = vpop.f32.mrf.mxu0
  %v106 = vadd.f32 %v62, %v105
  %v107 = vpop.f32.mrf.mxu0
  %108 = vdwg.mxu0
  %v109 = vld [vmem:[%s1] sm:$0x1]
  %v110 = vsub.f32 1.0, %v109
  %v111 = vmul.f32 %v110, -10000.0
  %v112 = vpack.c.bf16 %v103, %v103
  %114 = vrot.lane.b32.xlu0 %v112, 96
  %v115 = vpop.permute.xlu0 %114
  %vm116 = vcmask 130048
  %v118 = vsel %vm116, %v112, 0
  %v121 = vsel %vm116, %v115, 0
  %123 = vmatprep.subr.bf16.mxu0 0
  %124 = vmatpush1.bf16.xpose.msra.mxu0 0
  %125 = vmatprep.subr.bf16.mxu0 0
  %126 = vmatpush1.bf16.xpose.msra.mxu0 0
  %127 = vmatprep.subr.bf16.mxu0 0
  %128 = vmatpush1.bf16.xpose.msra.mxu0 0
  %129 = vmatprep.subr.bf16.mxu0 0
  %130 = vmatpush1.bf16.xpose.msra.mxu0 0
  %131 = vmatprep.subr.bf16.mxu0 0
  %132 = vmatpush1.bf16.xpose.msra.mxu0 0
  %133 = vmatprep.subr.bf16.mxu0 0
  %134 = vmatpush1.bf16.xpose.msra.mxu0 0
  %135 = vmatprep.subr.bf16.mxu0 0
  %136 = vmatpush1.bf16.xpose.msra.mxu0 0
  %137 = vmatprep.subr.bf16.mxu0 0
  %138 = vmatpush1.bf16.xpose.msra.mxu0 %v121
  %139 = vmatprep.subr.bf16.mxu0 0
  %140 = vmatpush2.bf16.xpose.msra.mxu0 0
  %141 = vmatprep.subr.bf16.mxu0 0
  %142 = vmatpush2.bf16.xpose.msra.mxu0 0
  %143 = vmatprep.subr.bf16.mxu0 0
  %144 = vmatpush2.bf16.xpose.msra.mxu0 0
  %145 = vmatprep.subr.bf16.mxu0 0
  %146 = vmatpush2.bf16.xpose.msra.mxu0 0
  %147 = vmatprep.subr.bf16.mxu0 0
  %148 = vmatpush2.bf16.xpose.msra.mxu0 0
  %149 = vmatprep.subr.bf16.mxu0 0
  %150 = vmatpush2.bf16.xpose.msra.mxu0 0
  %151 = vmatprep.subr.bf16.mxu0 0
  %152 = vmatpush2.bf16.xpose.msra.mxu0 0
  %153 = vmatprep.subr.bf16.mxu0 0
  %154 = vmatpush2.bf16.xpose.msra.mxu0 0
  %155 = vmatprep.mubr.bf16.mxu0 0
  %156 = vmatmul.mubr.bf16.gmra.mxu0 %v118
  %v157 = vpop.f32.mrf.mxu0
  %v158 = vadd.f32 0.0, %v157
  %v159 = vpop.f32.mrf.mxu0
  %v160 = vpop.f32.mrf.mxu0
  %v161 = vpop.f32.mrf.mxu0
  %162 = vdwg.mxu0
  %v163 = vmul.f32 %v158, 0.25
  %v164 = vlaneseq
  %v165 = vshrl.u32 %v164, 7
  %v166 = vsub.s32 0, %v165
  %v167 = vrot.slane %v111, %v166
  %v168 = vadd.f32 %v163, %v167
  %vm169 = vcmask 64512
  %v170 = vsel %vm169, %v168, -inf
  %171 = vmax.xlane.f32.xlu0 %v170
  %v172 = vpop.xlane.xlu0 %171
  %v173 = vsub.f32 %v168, %v172
  %v174 = vmul.f32 %v173, 1.442695
  %v175 = vpow.pop %v174
  %v176 = vsel %vm169, %v175, 0.0
  %177 = vadd.xlane.f32.xlu0 %v176
  %v178 = vpop.xlane.xlu0 %177
  %v179 = vrcp.pop %v178
  %v180 = vmul.f32 %v175, %v179
  %v181 = vpack.c.bf16 %v180, %v180
  %182 = vrot.lane.b32.xlu0 %v112, 64
  %v183 = vpop.permute.xlu0 %182
  %v185 = vsel %vm169, %v181, 0
  %vm187 = vcmask 1043456
  %v189 = vsel %vm187, %v183, 0
  %191 = vmatprep.subr.bf16.mxu0 0
  %192 = vmatpush1.bf16.msra.mxu0 0
  %193 = vmatprep.subr.bf16.mxu0 0
  %194 = vmatpush1.bf16.msra.mxu0 0
  %195 = vmatprep.subr.bf16.mxu0 0
  %196 = vmatpush1.bf16.msra.mxu0 0
  %197 = vmatprep.subr.bf16.mxu0 0
  %198 = vmatpush1.bf16.msra.mxu0 0
  %199 = vmatprep.subr.bf16.mxu0 0
  %200 = vmatpush1.bf16.msra.mxu0 0
  %201 = vmatprep.subr.bf16.mxu0 0
  %202 = vmatpush1.bf16.msra.mxu0 0
  %203 = vmatprep.subr.bf16.mxu0 0
  %204 = vmatpush1.bf16.msra.mxu0 0
  %205 = vmatprep.subr.bf16.mxu0 0
  %206 = vmatpush1.bf16.msra.mxu0 %v189
  %207 = vmatprep.subr.bf16.mxu0 0
  %208 = vmatpush2.bf16.msra.mxu0 0
  %209 = vmatprep.subr.bf16.mxu0 0
  %210 = vmatpush2.bf16.msra.mxu0 0
  %211 = vmatprep.subr.bf16.mxu0 0
  %212 = vmatpush2.bf16.msra.mxu0 0
  %213 = vmatprep.subr.bf16.mxu0 0
  %214 = vmatpush2.bf16.msra.mxu0 0
  %215 = vmatprep.subr.bf16.mxu0 0
  %216 = vmatpush2.bf16.msra.mxu0 0
  %217 = vmatprep.subr.bf16.mxu0 0
  %218 = vmatpush2.bf16.msra.mxu0 0
  %219 = vmatprep.subr.bf16.mxu0 0
  %220 = vmatpush2.bf16.msra.mxu0 0
  %221 = vmatprep.subr.bf16.mxu0 0
  %222 = vmatpush2.bf16.msra.mxu0 0
  %223 = vmatprep.mubr.bf16.mxu0 0
  %224 = vmatmul.mubr.bf16.gmra.mxu0 %v185
  %v225 = vpop.f32.mrf.mxu0
  %v226 = vadd.f32 0.0, %v225
  %v227 = vpop.f32.mrf.mxu0
  %v228 = vpop.f32.mrf.mxu0
  %v229 = vpop.f32.mrf.mxu0
  %230 = vdwg.mxu0
  %231 = vst.msk [vmem:[#allocation2] sm:$0xff] %vm116, %v226
  %232 = vrot.lane.b32.xlu0 %v112, 112
  %v233 = vpop.permute.xlu0 %232
  %234 = vrot.lane.b32.xlu0 %v112, 80
  %v235 = vpop.permute.xlu0 %234
  %v237 = vsel %vm116, %v233, 0
  %v240 = vsel %vm116, %v235, 0
  %242 = vmatprep.subr.bf16.mxu0 0
  %243 = vmatpush1.bf16.xpose.msra.mxu0 0
  %244 = vmatprep.subr.bf16.mxu0 0
  %245 = vmatpush1.bf16.xpose.msra.mxu0 0
  %246 = vmatprep.subr.bf16.mxu0 0
  %247 = vmatpush1.bf16.xpose.msra.mxu0 0
  %248 = vmatprep.subr.bf16.mxu0 0
  %249 = vmatpush1.bf16.xpose.msra.mxu0 0
  %250 = vmatprep.subr.bf16.mxu0 0
  %251 = vmatpush1.bf16.xpose.msra.mxu0 0
  %252 = vmatprep.subr.bf16.mxu0 0
  %253 = vmatpush1.bf16.xpose.msra.mxu0 0
  %254 = vmatprep.subr.bf16.mxu0 0
  %255 = vmatpush1.bf16.xpose.msra.mxu0 0
  %256 = vmatprep.subr.bf16.mxu0 0
  %257 = vmatpush1.bf16.xpose.msra.mxu0 %v240
  %258 = vmatprep.subr.bf16.mxu0 0
  %259 = vmatpush2.bf16.xpose.msra.mxu0 0
  %260 = vmatprep.subr.bf16.mxu0 0
  %261 = vmatpush2.bf16.xpose.msra.mxu0 0
  %262 = vmatprep.subr.bf16.mxu0 0
  %263 = vmatpush2.bf16.xpose.msra.mxu0 0
  %264 = vmatprep.subr.bf16.mxu0 0
  %265 = vmatpush2.bf16.xpose.msra.mxu0 0
  %266 = vmatprep.subr.bf16.mxu0 0
  %267 = vmatpush2.bf16.xpose.msra.mxu0 0
  %268 = vmatprep.subr.bf16.mxu0 0
  %269 = vmatpush2.bf16.xpose.msra.mxu0 0
  %270 = vmatprep.subr.bf16.mxu0 0
  %271 = vmatpush2.bf16.xpose.msra.mxu0 0
  %272 = vmatprep.subr.bf16.mxu0 0
  %273 = vmatpush2.bf16.xpose.msra.mxu0 0
  %274 = vmatprep.mubr.bf16.mxu0 0
  %275 = vmatmul.mubr.bf16.gmra.mxu0 %v237
  %v276 = vpop.f32.mrf.mxu0
  %v277 = vadd.f32 0.0, %v276
  %v278 = vpop.f32.mrf.mxu0
  %v279 = vpop.f32.mrf.mxu0
  %v280 = vpop.f32.mrf.mxu0
  %281 = vdwg.mxu0
  %v282 = vmul.f32 %v277, 0.25
  %v283 = vadd.f32 %v282, %v167
  %v284 = vsel %vm169, %v283, -inf
  %285 = vmax.xlane.f32.xlu0 %v284
  %v286 = vpop.xlane.xlu0 %285
  %v287 = vsub.f32 %v283, %v286
  %v288 = vmul.f32 %v287, 1.442695
  %v289 = vpow.pop %v288
  %v290 = vsel %vm169, %v289, 0.0
  %291 = vadd.xlane.f32.xlu0 %v290
  %v292 = vpop.xlane.xlu0 %291
  %v293 = vrcp.pop %v292
  %v294 = vmul.f32 %v289, %v293
  %v295 = vpack.c.bf16 %v294, %v294
  %296 = vrot.lane.b32.xlu0 %v112, 48
  %v297 = vpop.permute.xlu0 %296
  %v299 = vsel %vm169, %v295, 0
  %v302 = vsel %vm187, %v297, 0
  %304 = vmatprep.subr.bf16.mxu0 0
  %305 = vmatpush1.bf16.msra.mxu0 0
  %306 = vmatprep.subr.bf16.mxu0 0
  %307 = vmatpush1.bf16.msra.mxu0 0
  %308 = vmatprep.subr.bf16.mxu0 0
  %309 = vmatpush1.bf16.msra.mxu0 0
  %310 = vmatprep.subr.bf16.mxu0 0
  %311 = vmatpush1.bf16.msra.mxu0 0
  %312 = vmatprep.subr.bf16.mxu0 0
  %313 = vmatpush1.bf16.msra.mxu0 0
  %314 = vmatprep.subr.bf16.mxu0 0
  %315 = vmatpush1.bf16.msra.mxu0 0
  %316 = vmatprep.subr.bf16.mxu0 0
  %317 = vmatpush1.bf16.msra.mxu0 0
  %318 = vmatprep.subr.bf16.mxu0 0
  %319 = vmatpush1.bf16.msra.mxu0 %v302
  %320 = vmatprep.subr.bf16.mxu0 0
  %321 = vmatpush2.bf16.msra.mxu0 0
  %322 = vmatprep.subr.bf16.mxu0 0
  %323 = vmatpush2.bf16.msra.mxu0 0
  %324 = vmatprep.subr.bf16.mxu0 0
  %325 = vmatpush2.bf16.msra.mxu0 0
  %326 = vmatprep.subr.bf16.mxu0 0
  %327 = vmatpush2.bf16.msra.mxu0 0
  %328 = vmatprep.subr.bf16.mxu0 0
  %329 = vmatpush2.bf16.msra.mxu0 0
  %330 = vmatprep.subr.bf16.mxu0 0
  %331 = vmatpush2.bf16.msra.mxu0 0
  %332 = vmatprep.subr.bf16.mxu0 0
  %333 = vmatpush2.bf16.msra.mxu0 0
  %334 = vmatprep.subr.bf16.mxu0 0
  %335 = vmatpush2.bf16.msra.mxu0 0
  %336 = vmatprep.mubr.bf16.mxu0 0
  %337 = vmatmul.mubr.bf16.gmra.mxu0 %v299
  %v338 = vpop.f32.mrf.mxu0
  %v339 = vadd.f32 0.0, %v338
  %v340 = vpop.f32.mrf.mxu0
  %v341 = vpop.f32.mrf.mxu0
  %v342 = vpop.f32.mrf.mxu0
  %343 = vdwg.mxu0
  %345 = vrot.lane.b32.xlu0 %v339, 16
  %v346 = vpop.permute.xlu0 %345
  %vm348 = vcmask 261248
  %349 = vst.msk [vmem:[#allocation2] sm:$0xff] %vm348, %v346
  %v350 = vld [vmem:[%s1 + $0x1] sm:$0x1]
  %v351 = vsub.f32 1.0, %v350
  %v352 = vmul.f32 %v351, -10000.0
  %v353 = vpack.c.bf16 %v106, %v106
  %355 = vrot.lane.b32.xlu0 %v353, 96
  %v356 = vpop.permute.xlu0 %355
  %v358 = vsel %vm116, %v353, 0
  %v361 = vsel %vm116, %v356, 0
  %363 = vmatprep.subr.bf16.mxu0 0
  %364 = vmatpush1.bf16.xpose.msra.mxu0 0
  %365 = vmatprep.subr.bf16.mxu0 0
  %366 = vmatpush1.bf16.xpose.msra.mxu0 0
  %367 = vmatprep.subr.bf16.mxu0 0
  %368 = vmatpush1.bf16.xpose.msra.mxu0 0
  %369 = vmatprep.subr.bf16.mxu0 0
  %370 = vmatpush1.bf16.xpose.msra.mxu0 0
  %371 = vmatprep.subr.bf16.mxu0 0
  %372 = vmatpush1.bf16.xpose.msra.mxu0 0
  %373 = vmatprep.subr.bf16.mxu0 0
  %374 = vmatpush1.bf16.xpose.msra.mxu0 0
  %375 = vmatprep.subr.bf16.mxu0 0
  %376 = vmatpush1.bf16.xpose.msra.mxu0 0
  %377 = vmatprep.subr.bf16.mxu0 0
  %378 = vmatpush1.bf16.xpose.msra.mxu0 %v361
  %379 = vmatprep.subr.bf16.mxu0 0
  %380 = vmatpush2.bf16.xpose.msra.mxu0 0
  %381 = vmatprep.subr.bf16.mxu0 0
  %382 = vmatpush2.bf16.xpose.msra.mxu0 0
  %383 = vmatprep.subr.bf16.mxu0 0
  %384 = vmatpush2.bf16.xpose.msra.mxu0 0
  %385 = vmatprep.subr.bf16.mxu0 0
  %386 = vmatpush2.bf16.xpose.msra.mxu0 0
  %387 = vmatprep.subr.bf16.mxu0 0
  %388 = vmatpush2.bf16.xpose.msra.mxu0 0
  %389 = vmatprep.subr.bf16.mxu0 0
  %390 = vmatpush2.bf16.xpose.msra.mxu0 0
  %391 = vmatprep.subr.bf16.mxu0 0
  %392 = vmatpush2.bf16.xpose.msra.mxu0 0
  %393 = vmatprep.subr.bf16.mxu0 0
  %394 = vmatpush2.bf16.xpose.msra.mxu0 0
  %395 = vmatprep.mubr.bf16.mxu0 0
  %396 = vmatmul.mubr.bf16.gmra.mxu0 %v358
  %v397 = vpop.f32.mrf.mxu0
  %v398 = vadd.f32 0.0, %v397
  %v399 = vpop.f32.mrf.mxu0
  %v400 = vpop.f32.mrf.mxu0
  %v401 = vpop.f32.mrf.mxu0
  %402 = vdwg.mxu0
  %v403 = vmul.f32 %v398, 0.25
  %v404 = vlaneseq
  %v405 = vshrl.u32 %v404, 7
  %v406 = vsub.s32 0, %v405
  %v407 = vrot.slane %v352, %v406
  %v408 = vadd.f32 %v403, %v407
  %v409 = vsel %vm169, %v408, -inf
  %410 = vmax.xlane.f32.xlu0 %v409
  %v411 = vpop.xlane.xlu0 %410
  %v412 = vsub.f32 %v408, %v411
  %v413 = vmul.f32 %v412, 1.442695
  %v414 = vpow.pop %v413
  %v415 = vsel %vm169, %v414, 0.0
  %416 = vadd.xlane.f32.xlu0 %v415
  %v417 = vpop.xlane.xlu0 %416
  %v418 = vrcp.pop %v417
  %v419 = vmul.f32 %v414, %v418
  %v420 = vpack.c.bf16 %v419, %v419
  %421 = vrot.lane.b32.xlu0 %v353, 64
  %v422 = vpop.permute.xlu0 %421
  %v424 = vsel %vm169, %v420, 0
  %v427 = vsel %vm187, %v422, 0
  %429 = vmatprep.subr.bf16.mxu0 0
  %430 = vmatpush1.bf16.msra.mxu0 0
  %431 = vmatprep.subr.bf16.mxu0 0
  %432 = vmatpush1.bf16.msra.mxu0 0
  %433 = vmatprep.subr.bf16.mxu0 0
  %434 = vmatpush1.bf16.msra.mxu0 0
  %435 = vmatprep.subr.bf16.mxu0 0
  %436 = vmatpush1.bf16.msra.mxu0 0
  %437 = vmatprep.subr.bf16.mxu0 0
  %438 = vmatpush1.bf16.msra.mxu0 0
  %439 = vmatprep.subr.bf16.mxu0 0
  %440 = vmatpush1.bf16.msra.mxu0 0
  %441 = vmatprep.subr.bf16.mxu0 0
  %442 = vmatpush1.bf16.msra.mxu0 0
  %443 = vmatprep.subr.bf16.mxu0 0
  %444 = vmatpush1.bf16.msra.mxu0 %v427
  %445 = vmatprep.subr.bf16.mxu0 0
  %446 = vmatpush2.bf16.msra.mxu0 0
  %447 = vmatprep.subr.bf16.mxu0 0
  %448 = vmatpush2.bf16.msra.mxu0 0
  %449 = vmatprep.subr.bf16.mxu0 0
  %450 = vmatpush2.bf16.msra.mxu0 0
  %451 = vmatprep.subr.bf16.mxu0 0
  %452 = vmatpush2.bf16.msra.mxu0 0
  %453 = vmatprep.subr.bf16.mxu0 0
  %454 = vmatpush2.bf16.msra.mxu0 0
  %455 = vmatprep.subr.bf16.mxu0 0
  %456 = vmatpush2.bf16.msra.mxu0 0
  %457 = vmatprep.subr.bf16.mxu0 0
  %458 = vmatpush2.bf16.msra.mxu0 0
  %459 = vmatprep.subr.bf16.mxu0 0
  %460 = vmatpush2.bf16.msra.mxu0 0
  %461 = vmatprep.mubr.bf16.mxu0 0
  %462 = vmatmul.mubr.bf16.gmra.mxu0 %v424
  %v463 = vpop.f32.mrf.mxu0
  %v464 = vadd.f32 0.0, %v463
  %v465 = vpop.f32.mrf.mxu0
  %v466 = vpop.f32.mrf.mxu0
  %v467 = vpop.f32.mrf.mxu0
  %468 = vdwg.mxu0
  %469 = vst.msk [vmem:[#allocation2 + $0x8] sm:$0xff] %vm116, %v464
  %470 = vrot.lane.b32.xlu0 %v353, 112
  %v471 = vpop.permute.xlu0 %470
  %472 = vrot.lane.b32.xlu0 %v353, 80
  %v473 = vpop.permute.xlu0 %472
  %v475 = vsel %vm116, %v471, 0
  %v478 = vsel %vm116, %v473, 0
  %480 = vmatprep.subr.bf16.mxu0 0
  %481 = vmatpush1.bf16.xpose.msra.mxu0 0
  %482 = vmatprep.subr.bf16.mxu0 0
  %483 = vmatpush1.bf16.xpose.msra.mxu0 0
  %484 = vmatprep.subr.bf16.mxu0 0
  %485 = vmatpush1.bf16.xpose.msra.mxu0 0
  %486 = vmatprep.subr.bf16.mxu0 0
  %487 = vmatpush1.bf16.xpose.msra.mxu0 0
  %488 = vmatprep.subr.bf16.mxu0 0
  %489 = vmatpush1.bf16.xpose.msra.mxu0 0
  %490 = vmatprep.subr.bf16.mxu0 0
  %491 = vmatpush1.bf16.xpose.msra.mxu0 0
  %492 = vmatprep.subr.bf16.mxu0 0
  %493 = vmatpush1.bf16.xpose.msra.mxu0 0
  %494 = vmatprep.subr.bf16.mxu0 0
  %495 = vmatpush1.bf16.xpose.msra.mxu0 %v478
  %496 = vmatprep.subr.bf16.mxu0 0
  %497 = vmatpush2.bf16.xpose.msra.mxu0 0
  %498 = vmatprep.subr.bf16.mxu0 0
  %499 = vmatpush2.bf16.xpose.msra.mxu0 0
  %500 = vmatprep.subr.bf16.mxu0 0
  %501 = vmatpush2.bf16.xpose.msra.mxu0 0
  %502 = vmatprep.subr.bf16.mxu0 0
  %503 = vmatpush2.bf16.xpose.msra.mxu0 0
  %504 = vmatprep.subr.bf16.mxu0 0
  %505 = vmatpush2.bf16.xpose.msra.mxu0 0
  %506 = vmatprep.subr.bf16.mxu0 0
  %507 = vmatpush2.bf16.xpose.msra.mxu0 0
  %508 = vmatprep.subr.bf16.mxu0 0
  %509 = vmatpush2.bf16.xpose.msra.mxu0 0
  %510 = vmatprep.subr.bf16.mxu0 0
  %511 = vmatpush2.bf16.xpose.msra.mxu0 0
  %512 = vmatprep.mubr.bf16.mxu0 0
  %513 = vmatmul.mubr.bf16.gmra.mxu0 %v475
  %v514 = vpop.f32.mrf.mxu0
  %v515 = vadd.f32 0.0, %v514
  %v516 = vpop.f32.mrf.mxu0
  %v517 = vpop.f32.mrf.mxu0
  %v518 = vpop.f32.mrf.mxu0
  %519 = vdwg.mxu0
  %v520 = vmul.f32 %v515, 0.25
  %v521 = vadd.f32 %v520, %v407
  %v522 = vsel %vm169, %v521, -inf
  %523 = vmax.xlane.f32.xlu0 %v522
  %v524 = vpop.xlane.xlu0 %523
  %v525 = vsub.f32 %v521, %v524
  %v526 = vmul.f32 %v525, 1.442695
  %v527 = vpow.pop %v526
  %v528 = vsel %vm169, %v527, 0.0
  %529 = vadd.xlane.f32.xlu0 %v528
  %v530 = vpop.xlane.xlu0 %529
  %v531 = vrcp.pop %v530
  %v532 = vmul.f32 %v527, %v531
  %v533 = vpack.c.bf16 %v532, %v532
  %534 = vrot.lane.b32.xlu0 %v353, 48
  %v535 = vpop.permute.xlu0 %534
  %v537 = vsel %vm169, %v533, 0
  %v540 = vsel %vm187, %v535, 0
  %542 = vmatprep.subr.bf16.mxu0 0
  %543 = vmatpush1.bf16.msra.mxu0 0
  %544 = vmatprep.subr.bf16.mxu0 0
  %545 = vmatpush1.bf16.msra.mxu0 0
  %546 = vmatprep.subr.bf16.mxu0 0
  %547 = vmatpush1.bf16.msra.mxu0 0
  %548 = vmatprep.subr.bf16.mxu0 0
  %549 = vmatpush1.bf16.msra.mxu0 0
  %550 = vmatprep.subr.bf16.mxu0 0
  %551 = vmatpush1.bf16.msra.mxu0 0
  %552 = vmatprep.subr.bf16.mxu0 0
  %553 = vmatpush1.bf16.msra.mxu0 0
  %554 = vmatprep.subr.bf16.mxu0 0
  %555 = vmatpush1.bf16.msra.mxu0 0
  %556 = vmatprep.subr.bf16.mxu0 0
  %557 = vmatpush1.bf16.msra.mxu0 %v540
  %558 = vmatprep.subr.bf16.mxu0 0
  %559 = vmatpush2.bf16.msra.mxu0 0
  %560 = vmatprep.subr.bf16.mxu0 0
  %561 = vmatpush2.bf16.msra.mxu0 0
  %562 = vmatprep.subr.bf16.mxu0 0
  %563 = vmatpush2.bf16.msra.mxu0 0
  %564 = vmatprep.subr.bf16.mxu0 0
  %565 = vmatpush2.bf16.msra.mxu0 0
  %566 = vmatprep.subr.bf16.mxu0 0
  %567 = vmatpush2.bf16.msra.mxu0 0
  %568 = vmatprep.subr.bf16.mxu0 0
  %569 = vmatpush2.bf16.msra.mxu0 0
  %570 = vmatprep.subr.bf16.mxu0 0
  %571 = vmatpush2.bf16.msra.mxu0 0
  %572 = vmatprep.subr.bf16.mxu0 0
  %573 = vmatpush2.bf16.msra.mxu0 0
  %574 = vmatprep.mubr.bf16.mxu0 0
  %575 = vmatmul.mubr.bf16.gmra.mxu0 %v537
  %v576 = vpop.f32.mrf.mxu0
  %v577 = vadd.f32 0.0, %v576
  %v578 = vpop.f32.mrf.mxu0
  %v579 = vpop.f32.mrf.mxu0
  %v580 = vpop.f32.mrf.mxu0
  %581 = vdwg.mxu0
  %583 = vrot.lane.b32.xlu0 %v577, 16
  %v584 = vpop.permute.xlu0 %583
  %586 = vst.msk [vmem:[#allocation2 + $0x8] sm:$0xff] %vm348, %v584
  %v587 = vld [vmem:[#allocation2] sm:$0xff]
  %v588 = vld [vmem:[#allocation2 + $0x8] sm:$0xff]
  %v589 = vld [vmem:[%s4] sm:$0xff]
  %v590 = vld [vmem:[%s4 + $0x8] sm:$0xff]
  %v591 = vld [vmem:[%s4 + $0x10] sm:$0xff]
  %v592 = vld [vmem:[%s4 + $0x18] sm:$0xff]
  %v593 = vpack.c.bf16 %v588, %v587
  %v594 = vpack.c.bf16 %v590, %v589
  %v595 = vpack.c.bf16 %v592, %v591
  %v596 = vld [vmem:[%s5] sm:$0x1]
  %v598 = vlaneseq
  %v599 = vshrl.u32 %v598, 7
  %v600 = vsub.s32 0, %v599
  %v601 = vrot.slane %v596, %v600
  %v604 = vsel %vm64, %v593, 0
  %606 = vmatprep.subr.bf16.mxu0 0
  %607 = vmatpush1.bf16.msra.mxu0 0
  %608 = vmatprep.subr.bf16.mxu0 0
  %609 = vmatpush1.bf16.msra.mxu0 0
  %610 = vmatprep.subr.bf16.mxu0 0
  %611 = vmatpush1.bf16.msra.mxu0 0
  %612 = vmatprep.subr.bf16.mxu0 0
  %613 = vmatpush1.bf16.msra.mxu0 0
  %614 = vmatprep.subr.bf16.mxu0 0
  %615 = vmatpush1.bf16.msra.mxu0 0
  %616 = vmatprep.subr.bf16.mxu0 0
  %617 = vmatpush1.bf16.msra.mxu0 0
  %618 = vmatprep.subr.bf16.mxu0 0
  %619 = vmatpush1.bf16.msra.mxu0 %v595
  %620 = vmatprep.subr.bf16.mxu0 0
  %621 = vmatpush1.bf16.msra.mxu0 %v594
  %622 = vmatprep.subr.bf16.mxu0 0
  %623 = vmatpush2.bf16.msra.mxu0 0
  %624 = vmatprep.subr.bf16.mxu0 0
  %625 = vmatpush2.bf16.msra.mxu0 0
  %626 = vmatprep.subr.bf16.mxu0 0
  %627 = vmatpush2.bf16.msra.mxu0 0
  %628 = vmatprep.subr.bf16.mxu0 0
  %629 = vmatpush2.bf16.msra.mxu0 0
  %630 = vmatprep.subr.bf16.mxu0 0
  %631 = vmatpush2.bf16.msra.mxu0 0
  %632 = vmatprep.subr.bf16.mxu0 0
  %633 = vmatpush2.bf16.msra.mxu0 0
  %634 = vmatprep.subr.bf16.mxu0 0
  %635 = vmatpush2.bf16.msra.mxu0 0
  %636 = vmatprep.subr.bf16.mxu0 0
  %637 = vmatpush2.bf16.msra.mxu0 0
  %638 = vmatprep.mubr.bf16.mxu0 0
  %639 = vmatmul.mubr.bf16.gmra.mxu0 %v604
  %v640 = vpop.f32.mrf.mxu0
  %v641 = vadd.f32 %v601, %v640
  %v642 = vpop.f32.mrf.mxu0
  %v643 = vpop.f32.mrf.mxu0
  %v644 = vadd.f32 %v601, %v643
  %v645 = vpop.f32.mrf.mxu0
  %646 = vdwg.mxu0
  %v647 = vadd.f32 %v641, %v48
  %v648 = vadd.f32 %v644, %v49
  %v649 = vld [vmem:[%s6] sm:$0x1]
  %v650 = vld [vmem:[%s7] sm:$0x1]
  %v651 = vsel %vm64, %v647, 0.0
  %652 = vadd.xlane.f32.xlu0 %v651
  %v653 = vpop.xlane.xlu0 %652
  %v654 = vsel %vm64, %v648, 0.0
  %655 = vadd.xlane.f32.xlu0 %v654
  %v656 = vpop.xlane.xlu0 %655
  %v657 = vrcp.pop 32.0
  %v658 = vmul.f32 %v653, %v657
  %v659 = vmul.f32 %v656, %v657
  %v660 = vsub.f32 %v647, %v658
  %v661 = vsub.f32 %v648, %v659
  %v662 = vmul.f32 %v660, %v660
  %v663 = vmul.f32 %v661, %v661
  %v664 = vsel %vm64, %v662, 0.0
  %665 = vadd.xlane.f32.xlu0 %v664
  %v666 = vpop.xlane.xlu0 %665
  %v667 = vsel %vm64, %v663, 0.0
  %668 = vadd.xlane.f32.xlu0 %v667
  %v669 = vpop.xlane.xlu0 %668
  %v670 = vmul.f32 %v666, %v657
  %v671 = vmul.f32 %v669, %v657
  %v672 = vadd.f32 %v670, 1e-12
  %v673 = vadd.f32 %v671, 1e-12
  %v674 = vrsqrt.pop %v672
  %v675 = vrsqrt.pop %v673
  %v676 = vmul.f32 %v660, %v674
  %v677 = vmul.f32 %v661, %v675
  %v679 = vlaneseq
  %v680 = vshrl.u32 %v679, 7
  %v681 = vsub.s32 0, %v680
  %v682 = vrot.slane %v649, %v681
  %v684 = vmul.f32 %v676, %v682
  %v685 = vmul.f32 %v677, %v682
  %v687 = vlaneseq
  %v688 = vshrl.u32 %v687, 7
  %v689 = vsub.s32 0, %v688
  %v690 = vrot.slane %v650, %v689
  %v692 = vadd.f32 %v684, %v690
  %v693 = vadd.f32 %v685, %v690
  %v694 = vld [vmem:[%s8] sm:$0xff]
  %v695 = vld [vmem:[%s8 + $0x8] sm:$0xff]
  %v696 = vld [vmem:[%s8 + $0x10] sm:$0xff]
  %v697 = vld [vmem:[%s8 + $0x18] sm:$0xff]
  %v698 = vpack.c.bf16 %v693, %v692
  %v699 = vpack.c.bf16 %v695, %v694
  %v700 = vpack.c.bf16 %v697, %v696
  %v701 = vld [vmem:[%s9] sm:$0x1]
  %v703 = vlaneseq
  %v704 = vshrl.u32 %v703, 7
  %v705 = vsub.s32 0, %v704
  %v706 = vrot.slane %v701, %v705
  %v709 = vsel %vm64, %v698, 0
  %711 = vmatprep.subr.bf16.mxu0 0
  %712 = vmatpush1.bf16.msra.mxu0 0
  %713 = vmatprep.subr.bf16.mxu0 0
  %714 = vmatpush1.bf16.msra.mxu0 0
  %715 = vmatprep.subr.bf16.mxu0 0
  %716 = vmatpush1.bf16.msra.mxu0 0
  %717 = vmatprep.subr.bf16.mxu0 0
  %718 = vmatpush1.bf16.msra.mxu0 0
  %719 = vmatprep.subr.bf16.mxu0 0
  %720 = vmatpush1.bf16.msra.mxu0 0
  %721 = vmatprep.subr.bf16.mxu0 0
  %722 = vmatpush1.bf16.msra.mxu0 0
  %723 = vmatprep.subr.bf16.mxu0 0
  %724 = vmatpush1.bf16.msra.mxu0 %v700
  %725 = vmatprep.subr.bf16.mxu0 0
  %726 = vmatpush1.bf16.msra.mxu0 %v699
  %727 = vmatprep.subr.bf16.mxu0 0
  %728 = vmatpush2.bf16.msra.mxu0 0
  %729 = vmatprep.subr.bf16.mxu0 0
  %730 = vmatpush2.bf16.msra.mxu0 0
  %731 = vmatprep.subr.bf16.mxu0 0
  %732 = vmatpush2.bf16.msra.mxu0 0
  %733 = vmatprep.subr.bf16.mxu0 0
  %734 = vmatpush2.bf16.msra.mxu0 0
  %735 = vmatprep.subr.bf16.mxu0 0
  %736 = vmatpush2.bf16.msra.mxu0 0
  %737 = vmatprep.subr.bf16.mxu0 0
  %738 = vmatpush2.bf16.msra.mxu0 0
  %739 = vmatprep.subr.bf16.mxu0 0
  %740 = vmatpush2.bf16.msra.mxu0 0
  %741 = vmatprep.subr.bf16.mxu0 0
  %742 = vmatpush2.bf16.msra.mxu0 0
  %743 = vmatprep.mubr.bf16.mxu0 0
  %744 = vmatmul.mubr.bf16.gmra.mxu0 %v709
  %v745 = vpop.f32.mrf.mxu0
  %v746 = vadd.f32 %v706, %v745
  %v747 = vpop.f32.mrf.mxu0
  %v748 = vpop.f32.mrf.mxu0
  %v749 = vadd.f32 %v706, %v748
  %v750 = vpop.f32.mrf.mxu0
  %751 = vdwg.mxu0
  %v752 = vmul.f32 %v746, 0.5
  %v753 = vmul.f32 %v749, 0.5
  %v754 = vmul.f32 %v746, 0.044715
  %v755 = vmul.f32 %v749, 0.044715
  %v756 = vmul.f32 %v754, %v746
  %v757 = vmul.f32 %v755, %v749
  %v758 = vmul.f32 %v756, %v746
  %v759 = vmul.f32 %v757, %v749
  %v760 = vadd.f32 %v746, %v758
  %v761 = vadd.f32 %v749, %v759
  %v762 = vmul.f32 %v760, 0.7978846
  %v763 = vmul.f32 %v761, 0.7978846
  %v764 = vtanh.pop %v762
  %v765 = vtanh.pop %v763
  %v766 = vadd.f32 %v764, 1.0
  %v767 = vadd.f32 %v765, 1.0
  %v768 = vmul.f32 %v752, %v766
  %v769 = vmul.f32 %v753, %v767
  %v770 = vld [vmem:[%s10] sm:$0xff]
  %v771 = vld [vmem:[%s10 + $0x8] sm:$0xff]
  %v772 = vld [vmem:[%s10 + $0x10] sm:$0xff]
  %v773 = vld [vmem:[%s10 + $0x18] sm:$0xff]
  %v774 = vld [vmem:[%s10 + $0x20] sm:$0xff]
  %v775 = vld [vmem:[%s10 + $0x28] sm:$0xff]
  %v776 = vld [vmem:[%s10 + $0x30] sm:$0xff]
  %v777 = vld [vmem:[%s10 + $0x38] sm:$0xff]
  %v778 = vpack.c.bf16 %v769, %v768
  %v779 = vpack.c.bf16 %v771, %v770
  %v780 = vpack.c.bf16 %v773, %v772
  %v781 = vpack.c.bf16 %v775, %v774
  %v782 = vpack.c.bf16 %v777, %v776
  %v783 = vld [vmem:[%s11] sm:$0x1]
  %v785 = vlaneseq
  %v786 = vshrl.u32 %v785, 7
  %v787 = vsub.s32 0, %v786
  %v788 = vrot.slane %v783, %v787
  %vm790 = vcmask 523264
  %v792 = vsel %vm790, %v778, 0
  %794 = vmatprep.subr.bf16.mxu0 0
  %795 = vmatpush1.bf16.msra.mxu0 0
  %796 = vmatprep.subr.bf16.mxu0 0
  %797 = vmatpush1.bf16.msra.mxu0 0
  %798 = vmatprep.subr.bf16.mxu0 0
  %799 = vmatpush1.bf16.msra.mxu0 0
  %800 = vmatprep.subr.bf16.mxu0 0
  %801 = vmatpush1.bf16.msra.mxu0 0
  %802 = vmatprep.subr.bf16.mxu0 0
  %803 = vmatpush1.bf16.msra.mxu0 %v782
  %804 = vmatprep.subr.bf16.mxu0 0
  %805 = vmatpush1.bf16.msra.mxu0 %v781
  %806 = vmatprep.subr.bf16.mxu0 0
  %807 = vmatpush1.bf16.msra.mxu0 %v780
  %808 = vmatprep.subr.bf16.mxu0 0
  %809 = vmatpush1.bf16.msra.mxu0 %v779
  %810 = vmatprep.subr.bf16.mxu0 0
  %811 = vmatpush2.bf16.msra.mxu0 0
  %812 = vmatprep.subr.bf16.mxu0 0
  %813 = vmatpush2.bf16.msra.mxu0 0
  %814 = vmatprep.subr.bf16.mxu0 0
  %815 = vmatpush2.bf16.msra.mxu0 0
  %816 = vmatprep.subr.bf16.mxu0 0
  %817 = vmatpush2.bf16.msra.mxu0 0
  %818 = vmatprep.subr.bf16.mxu0 0
  %819 = vmatpush2.bf16.msra.mxu0 0
  %820 = vmatprep.subr.bf16.mxu0 0
  %821 = vmatpush2.bf16.msra.mxu0 0
  %822 = vmatprep.subr.bf16.mxu0 0
  %823 = vmatpush2.bf16.msra.mxu0 0
  %824 = vmatprep.subr.bf16.mxu0 0
  %825 = vmatpush2.bf16.msra.mxu0 0
  %826 = vmatprep.mubr.bf16.mxu0 0
  %827 = vmatmul.mubr.bf16.gmra.mxu0 %v792
  %v828 = vpop.f32.mrf.mxu0
  %v829 = vadd.f32 %v788, %v828
  %v830 = vpop.f32.mrf.mxu0
  %v831 = vpop.f32.mrf.mxu0
  %v832 = vadd.f32 %v788, %v831
  %v833 = vpop.f32.mrf.mxu0
  %834 = vdwg.mxu0
  %v835 = vadd.f32 %v829, %v692
  %v836 = vadd.f32 %v832, %v693
  %v837 = vld [vmem:[%s12] sm:$0x1]
  %v838 = vld [vmem:[%s13] sm:$0x1]
  %v839 = vsel %vm64, %v835, 0.0
  %840 = vadd.xlane.f32.xlu0 %v839
  %v841 = vpop.xlane.xlu0 %840
  %v842 = vsel %vm64, %v836, 0.0
  %843 = vadd.xlane.f32.xlu0 %v842
  %v844 = vpop.xlane.xlu0 %843
  %v845 = vmul.f32 %v841, %v657
  %v846 = vmul.f32 %v844, %v657
  %v847 = vsub.f32 %v835, %v845
  %v848 = vsub.f32 %v836, %v846
  %v849 = vmul.f32 %v847, %v847
  %v850 = vmul.f32 %v848, %v848
  %v851 = vsel %vm64, %v849, 0.0
  %852 = vadd.xlane.f32.xlu0 %v851
  %v853 = vpop.xlane.xlu0 %852
  %v854 = vsel %vm64, %v850, 0.0
  %855 = vadd.xlane.f32.xlu0 %v854
  %v856 = vpop.xlane.xlu0 %855
  %v857 = vmul.f32 %v853, %v657
  %v858 = vmul.f32 %v856, %v657
  %v859 = vadd.f32 %v857, 1e-12
  %v860 = vadd.f32 %v858, 1e-12
  %v861 = vrsqrt.pop %v859
  %v862 = vrsqrt.pop %v860
  %v863 = vmul.f32 %v847, %v861
  %v864 = vmul.f32 %v848, %v862
  %v866 = vlaneseq
  %v867 = vshrl.u32 %v866, 7
  %v868 = vsub.s32 0, %v867
  %v869 = vrot.slane %v837, %v868
  %v871 = vmul.f32 %v863, %v869
  %v872 = vmul.f32 %v864, %v869
  %v874 = vlaneseq
  %v875 = vshrl.u32 %v874, 7
  %v876 = vsub.s32 0, %v875
  %v877 = vrot.slane %v838, %v876
  %v879 = vadd.f32 %v871, %v877
  %v880 = vadd.f32 %v872, %v877
  %881 = vst.msk [vmem:[%s14] sm:$0xff] %vm64, %v879
  %882 = vst.msk [vmem:[%s14 + $0x8] sm:$0xff] %vm64, %v880
  // Predicated region
  $region58: #{multimodal_bert_forward.5} parent=0 // pred_check
    _
  $region59: #{multimodal_bert_forward.5} parent=0 // pred_check_branch
    %884 = sbr.rel (0) target = $region61
  $region60: #{multimodal_bert_forward.5} parent=0 // pred_region
    _
  $region61: #{multimodal_bert_forward.5} parent=0 // pred_fallthru
    _
  // Predicated region
  $region62: #{multimodal_bert_forward.5} parent=0 // pred_check
    _
  $region63: #{multimodal_bert_forward.5} parent=0 // pred_check_branch
    %886 = sbr.rel (0) target = $region65
  $region64: #{multimodal_bert_forward.5} parent=0 // pred_region
    _
  $region65: #{multimodal_bert_forward.5} parent=0 // pred_fallthru
    _

</llo_original>
